<compile_context>
chip_gen: v6e
topology: v6e:2x2x1
jax: 0.10.0
libtpu: 0.0.40
codegen_flags: <defaults>
</compile_context>

<pallas_src>
import numpy as np
import jax
import jax.numpy as jnp
from jax.experimental import pallas as pl
from jax.experimental.pallas import tpu as pltpu


_COMPUTE_DTYPE = jnp.bfloat16   # MXU operand dtype (accumulation stays f32)
_LANE = 128
_SUBLANE = 8


def _round_up(x, m):
    return (x + m - 1) // m * m


def _elu_f32(y):
    # ELU(alpha=1) in f32; clamp before exp so the unused branch never overflows.
    return jnp.where(y > 0, y, jnp.exp(jnp.minimum(y, 0.0)) - 1.0)


# -----------------------------------------------------------------------------
# Fused Pallas kernel: all decoder blocks applied back-to-back on one row tile.
#   refs = (feat, skip_0..skip_{nb-1}, Wh_0..Wh_{nb-1}, Ws_0..Ws_{nb-1},
#           b_0..b_{nb-1}, out)
#   block k:  y = ELU( h @ Wh_k + skip_k @ Ws_k + b_k ),   h <- y (bf16)
# -----------------------------------------------------------------------------
def _make_fused_decoder_kernel(num_blocks):
    def kernel(*refs):
        nb = num_blocks
        feat_ref = refs[0]                              # (tn, c0*f0) f32
        skip_refs = refs[1:1 + nb]                      # (tn, c_k*f_k) f32
        wh_refs = refs[1 + nb:1 + 2 * nb]               # bf16 dense ConvT (feature rows)
        ws_refs = refs[1 + 2 * nb:1 + 3 * nb]           # bf16 dense ConvT (skip rows)
        b_refs = refs[1 + 3 * nb:1 + 4 * nb]            # (1, d_out) f32
        o_ref = refs[1 + 4 * nb]                        # (tn, d_out_pad) f32

        h = feat_ref[...].astype(_COMPUTE_DTYPE)        # in-kernel bf16 cast
        y = None
        for k in range(nb):
            skip = skip_refs[k][...].astype(_COMPUTE_DTYPE)
            y = (jnp.dot(h, wh_refs[k][...], preferred_element_type=jnp.float32)
                 + jnp.dot(skip, ws_refs[k][...], preferred_element_type=jnp.float32)
                 + b_refs[k][...])
            y = _elu_f32(y)
            if k + 1 < nb:
                h = y.astype(_COMPUTE_DTYPE)            # bf16 operand for next block
        o_ref[...] = y.astype(o_ref.dtype)              # lane-dense (padded) store

    return kernel


# -----------------------------------------------------------------------------
# Dense matrix equivalent of ConvTranspose1d:
#   out[n, co, fo] = bias[co] + sum_{ci,fi,k} in[n, ci, fi] * W[ci, co, k]
#   with fo = fi*stride - padding + k,  Fo = (Fi-1)*stride - 2*padding + K
# -----------------------------------------------------------------------------
def conv_transpose1d_matrix(weight_np, f_in, stride, padding):
    ci, co, k = weight_np.shape
    f_out = (f_in - 1) * stride - 2 * padding + k
    mat = np.zeros((ci * f_in, co * f_out), dtype=np.float32)
    for c in range(ci):
        for fi in range(f_in):
            for kk in range(k):
                fo = fi * stride - padding + kk
                if 0 <= fo < f_out:
                    mat[c * f_in + fi, np.arange(co) * f_out + fo] += weight_np[c, :, kk]
    return mat, f_out


class FullBandDecoderBlock:
    """Parameter holder for ConvTranspose1d(Ci, Co, K, stride, padding) + ELU."""

    def __init__(self, key, in_channels, out_channels, kernel_size, stride, padding):
        kw, kb = jax.random.split(key)
        bound = 1.0 / np.sqrt(in_channels * kernel_size)
        # PyTorch ConvTranspose1d weight layout: (in_channels, out_channels, K)
        self.weight = jax.random.uniform(
            kw, (in_channels, out_channels, kernel_size),
            minval=-bound, maxval=bound, dtype=jnp.float32)
        self.bias = jax.random.uniform(
            kb, (out_channels,), minval=-bound, maxval=bound, dtype=jnp.float32)
        # Host copies so the dense matrices are built without pulling traced
        # values (keeps the forward jit-compatible).
        self.weight_np = np.asarray(self.weight, dtype=np.float32)
        self.bias_np = np.asarray(self.bias, dtype=np.float32)
        self.in_channels = in_channels
        self.out_channels = out_channels
        self.kernel_size = kernel_size
        self.stride = stride
        self.padding = padding


class FullBandDecoder:
    """Chains FullBandDecoderBlocks, consuming one skip connection per block.

    The whole chain runs as a single fused pallas_call, gridded over frames.
    """

    def __init__(self, key, full_band_decoder_config, row_tile=256):
        self.blocks = []
        keys = jax.random.split(key, len(full_band_decoder_config))
        for k, (_, params) in zip(keys, full_band_decoder_config.items()):
            self.blocks.append(FullBandDecoderBlock(k, **params))
        self.row_tile = row_tile      # max rows per grid step (sweep for large N)
        self._plan_cache = {}         # (feature (c,f), skip (c,f)s) -> device params

    # ---- one-time (per shape signature) host-side preparation ---------------
    def _build_plan(self, feat_cf, skip_cfs):
        c, f = feat_cf
        wh_list, ws_list, biases = [], [], []
        d_out = d_out_pad = None
        for i, blk in enumerate(self.blocks):
            assert skip_cfs[i] == (c, f), "skip connection shape mismatch"
            assert blk.in_channels == 2 * c, "in_channels must equal 2 * feature channels"
            mat, f_out = conv_transpose1d_matrix(blk.weight_np, f, blk.stride, blk.padding)
            d_out = blk.out_channels * f_out
            bias_row = np.repeat(blk.bias_np, f_out)[None, :]       # (1, Co*Fo) co-major
            if i == len(self.blocks) - 1:
                # Lane-dense output: pad final columns to a multiple of 128 lanes.
                d_out_pad = _round_up(d_out, _LANE)
                if d_out_pad != d_out:
                    mat = np.pad(mat, ((0, 0), (0, d_out_pad - d_out)))
                    bias_row = np.pad(bias_row, ((0, 0), (0, d_out_pad - d_out)))
            # Split rows: first c*f rows are driven by the running feature
            # (concat([feature, encode_out], dim=1) puts feature channels first),
            # the rest by the skip connection.
            split = c * f
            wh_list.append(jnp.asarray(mat[:split], dtype=_COMPUTE_DTYPE))
            ws_list.append(jnp.asarray(mat[split:], dtype=_COMPUTE_DTYPE))
            biases.append(jnp.asarray(bias_row, dtype=jnp.float32))
            c, f = blk.out_channels, f_out                           # next block's (c, f)
        return dict(
            wh=wh_list, ws=ws_list, biases=biases,
            d_out=d_out, d_out_pad=d_out_pad,
            out_channels=self.blocks[-1].out_channels, f_out=f,
        )

    # ---- forward -------------------------------------------------------------
    def __call__(self, feature, encode_outs):
        assert len(encode_outs) == len(self.blocks)
        n, c, f = feature.shape
        skip_cfs = tuple((int(e.shape[1]), int(e.shape[2])) for e in encode_outs)
        key = ((c, f), skip_cfs)
        if key not in self._plan_cache:
            self._plan_cache[key] = self._build_plan((c, f), skip_cfs)
        plan = self._plan_cache[key]
        nb = len(self.blocks)

        # Flatten to (N, C*F); stays f32 -> the bf16 cast happens inside the kernel.
        feat2d = feature.reshape(n, -1)
        skips = [e.reshape(n, -1) for e in encode_outs]

        # Row tiling: tn must be a multiple of 8 (sublane). Prefer 2 grid steps
        # (keeps both v7x TensorCores busy with "parallel"; costs one ~0.35us
        # extra step on single-TC v5e/v6e) without padding when N allows it.
        n8 = _round_up(n, _SUBLANE)
        half = n8 // 2
        if _SUBLANE <= half <= self.row_tile and half % _SUBLANE == 0:
            tn = half                    # 2 steps, no extra padding for e.g. N=240
        elif n8 <= self.row_tile:
            tn = n8                      # single step
        else:
            tn = self.row_tile           # production sizes: sweep row_tile
        n_pad = _round_up(n8, tn)
        if n_pad != n:
            pad = n_pad - n
            feat2d = jnp.pad(feat2d, ((0, pad), (0, 0)))
            skips = [jnp.pad(s, ((0, pad), (0, 0))) for s in skips]

        def row_spec(width):
            return pl.BlockSpec((tn, width), lambda i: (i, 0))

        def full_spec(shape):
            return pl.BlockSpec(tuple(int(s) for s in shape), lambda i: (0, 0))

        in_specs = (
            [row_spec(int(feat2d.shape[1]))]
            + [row_spec(int(s.shape[1])) for s in skips]
            + [full_spec(w.shape) for w in plan["wh"]]
            + [full_spec(w.shape) for w in plan["ws"]]
            + [full_spec(b.shape) for b in plan["biases"]]
        )

        out = pl.pallas_call(
            _make_fused_decoder_kernel(nb),
            out_shape=jax.ShapeDtypeStruct((n_pad, plan["d_out_pad"]), jnp.float32),
            grid=(n_pad // tn,),
            in_specs=in_specs,
            out_specs=row_spec(plan["d_out_pad"]),
            compiler_params=pltpu.CompilerParams(
                dimension_semantics=("parallel",)),
        )(feat2d, *skips, *plan["wh"], *plan["ws"], *plan["biases"])

        out = out[:n, :plan["d_out"]]
        return out.reshape(n, plan["out_channels"], plan["f_out"])


# -----------------------------------------------------------------------------
# Pure-JAX reference (lax conv, no Pallas). Inputs/weights are rounded to bf16
# exactly like the kernel does (accumulation stays f32 in both), so the
# comparison tolerance can stay tight.
# -----------------------------------------------------------------------------
def _q_bf16(x):
    return x.astype(jnp.bfloat16).astype(jnp.float32)


def ref_full_band_decoder(decoder, feature, encode_outs):
    for blk, enc in zip(decoder.blocks, encode_outs):
        x = _q_bf16(jnp.concatenate([feature, enc], axis=1))        # (N, Ci, Fi)
        w = _q_bf16(blk.weight)
        k = blk.kernel_size
        rhs = jnp.flip(w, axis=-1).transpose(1, 0, 2)               # (Co, Ci, K)
        y = jax.lax.conv_general_dilated(
            x, rhs, window_strides=(1,),
            padding=[(k - 1 - blk.padding, k - 1 - blk.padding)],
            lhs_dilation=(blk.stride,),
            dimension_numbers=("NCH", "OIH", "NCH"),
            precision=jax.lax.Precision.HIGHEST)
        y = y + blk.bias[None, :, None]
        feature = jnp.where(y > 0, y, jnp.exp(jnp.minimum(y, 0.0)) - 1.0)
    return feature


# -----------------------------------------------------------------------------
# Main
# -----------------------------------------------------------------------------
if __name__ == "__main__":
    # Small FSPEN-like full-band decoder config (mirrors a 3-stage encoder with
    # skip concat, hence in_channels = 2 * matching encoder out_channels).
    FULL_BAND_DECODER_CONFIG = {
        "decoder1": dict(in_channels=32, out_channels=8, kernel_size=6, stride=2, padding=2),
        "decoder2": dict(in_channels=16, out_channels=4, kernel_size=8, stride=2, padding=3),
        "decoder3": dict(in_channels=8,  out_channels=2, kernel_size=6, stride=2, padding=2),
    }

    key = jax.random.PRNGKey(0)
    k_params, k_feat, k_e3, k_e2, k_e1 = jax.random.split(key, 5)

    B, T = 2, 120
    N = B * T   # 240 frames -> two 120-row grid steps, no row padding

    # Bottleneck feature and encoder skip outputs (deepest first, as fed by fspen.py)
    feature = jax.random.normal(k_feat, (N, 16, 4), dtype=jnp.float32)
    encode_outs = [
        jax.random.normal(k_e3, (N, 16, 4), dtype=jnp.float32),   # encoder3 out
        jax.random.normal(k_e2, (N, 8, 8), dtype=jnp.float32),    # encoder2 out
        jax.random.normal(k_e1, (N, 4, 16), dtype=jnp.float32),   # encoder1 out
    ]

    decoder = FullBandDecoder(k_params, FULL_BAND_DECODER_CONFIG)

    out = jax.block_until_ready(decoder(feature, encode_outs))
    assert out.shape == (N, 2, 32), out.shape

    ref = jax.block_until_ready(ref_full_band_decoder(decoder, feature, encode_outs))
    np.testing.assert_allclose(np.asarray(out), np.asarray(ref), atol=1e-3, rtol=1e-3)

    print("KERNEL_OK")
</pallas_src>

<mosaic_0001>
module attributes {stable_mosaic.version = 11 : i64} {
  func.func @kernel(%arg0: i32, %arg1: memref<120x64xf32, #tpu.memory_space<vmem>>, %arg2: memref<120x64xf32, #tpu.memory_space<vmem>>, %arg3: memref<120x64xf32, #tpu.memory_space<vmem>>, %arg4: memref<120x64xf32, #tpu.memory_space<vmem>>, %arg5: memref<64x64xbf16, #tpu.memory_space<vmem>>, %arg6: memref<64x64xbf16, #tpu.memory_space<vmem>>, %arg7: memref<64x128xbf16, #tpu.memory_space<vmem>>, %arg8: memref<64x64xbf16, #tpu.memory_space<vmem>>, %arg9: memref<64x64xbf16, #tpu.memory_space<vmem>>, %arg10: memref<64x128xbf16, #tpu.memory_space<vmem>>, %arg11: memref<1x64xf32, #tpu.memory_space<vmem>>, %arg12: memref<1x64xf32, #tpu.memory_space<vmem>>, %arg13: memref<1x128xf32, #tpu.memory_space<vmem>>, %arg14: memref<120x128xf32, #tpu.memory_space<vmem>>) attributes {dimension_semantics = [#tpu.dimension_semantics<parallel>], iteration_bounds = array<i64: 2>, scalar_prefetch = 0 : i64, scratch_operands = 0 : i64, tpu.core_type = #tpu.core_type<tc>, window_params = [{transform_indices = @transform_0, window_bounds = array<i64: 120, 64>}, {transform_indices = @transform_1, window_bounds = array<i64: 120, 64>}, {transform_indices = @transform_2, window_bounds = array<i64: 120, 64>}, {transform_indices = @transform_3, window_bounds = array<i64: 120, 64>}, {pipeline_mode = #tpu.pipeline_mode<synchronous>, transform_indices = @transform_4, window_bounds = array<i64: 64, 64>}, {pipeline_mode = #tpu.pipeline_mode<synchronous>, transform_indices = @transform_5, window_bounds = array<i64: 64, 64>}, {pipeline_mode = #tpu.pipeline_mode<synchronous>, transform_indices = @transform_6, window_bounds = array<i64: 64, 128>}, {pipeline_mode = #tpu.pipeline_mode<synchronous>, transform_indices = @transform_7, window_bounds = array<i64: 64, 64>}, {pipeline_mode = #tpu.pipeline_mode<synchronous>, transform_indices = @transform_8, window_bounds = array<i64: 64, 64>}, {pipeline_mode = #tpu.pipeline_mode<synchronous>, transform_indices = @transform_9, window_bounds = array<i64: 64, 128>}, {pipeline_mode = #tpu.pipeline_mode<synchronous>, transform_indices = @transform_10, window_bounds = array<i64: 1, 64>}, {pipeline_mode = #tpu.pipeline_mode<synchronous>, transform_indices = @transform_11, window_bounds = array<i64: 1, 64>}, {pipeline_mode = #tpu.pipeline_mode<synchronous>, transform_indices = @transform_12, window_bounds = array<i64: 1, 128>}, {transform_indices = @transform_13, window_bounds = array<i64: 120, 128>}]} {
    %c0 = arith.constant 0 : index
    %c0_0 = arith.constant 0 : index
    %0 = vector.load %arg1[%c0, %c0_0] : memref<120x64xf32, #tpu.memory_space<vmem>>, vector<120x64xf32>
    %1 = arith.truncf %0 : vector<120x64xf32> to vector<120x64xbf16>
    %c0_1 = arith.constant 0 : index
    %c0_2 = arith.constant 0 : index
    %2 = vector.load %arg2[%c0_1, %c0_2] : memref<120x64xf32, #tpu.memory_space<vmem>>, vector<120x64xf32>
    %3 = arith.truncf %2 : vector<120x64xf32> to vector<120x64xbf16>
    %c0_3 = arith.constant 0 : index
    %c0_4 = arith.constant 0 : index
    %4 = vector.load %arg5[%c0_3, %c0_4] : memref<64x64xbf16, #tpu.memory_space<vmem>>, vector<64x64xbf16>
    %cst = arith.constant dense<0.000000e+00> : vector<120x64xf32>
    %5 = tpu.matmul %1, %4, %cst {dimension_numbers = #tpu.dot_dimension_numbers<[1], [0], [0], [1], [0, 0, 1, 1], [], []>} : vector<120x64xbf16>, vector<64x64xbf16>, vector<120x64xf32> -> vector<120x64xf32>
    %c0_5 = arith.constant 0 : index
    %c0_6 = arith.constant 0 : index
    %6 = vector.load %arg8[%c0_5, %c0_6] : memref<64x64xbf16, #tpu.memory_space<vmem>>, vector<64x64xbf16>
    %cst_7 = arith.constant dense<0.000000e+00> : vector<120x64xf32>
    %7 = tpu.matmul %3, %6, %cst_7 {dimension_numbers = #tpu.dot_dimension_numbers<[1], [0], [0], [1], [0, 0, 1, 1], [], []>} : vector<120x64xbf16>, vector<64x64xbf16>, vector<120x64xf32> -> vector<120x64xf32>
    %8 = arith.addf %5, %7 : vector<120x64xf32>
    %c0_8 = arith.constant 0 : index
    %c0_9 = arith.constant 0 : index
    %9 = vector.load %arg11[%c0_8, %c0_9] : memref<1x64xf32, #tpu.memory_space<vmem>>, vector<1x64xf32>
    %10 = vector.broadcast %9 : vector<1x64xf32> to vector<120x64xf32>
    %11 = arith.addf %8, %10 : vector<120x64xf32>
    %cst_10 = arith.constant 0.000000e+00 : f32
    %12 = vector.broadcast %cst_10 : f32 to vector<120x64xf32>
    %13 = arith.cmpf ogt, %11, %12 : vector<120x64xf32>
    %cst_11 = arith.constant 0.000000e+00 : f32
    %14 = vector.broadcast %cst_11 : f32 to vector<120x64xf32>
    %15 = arith.minimumf %11, %14 : vector<120x64xf32>
    %16 = math.exp %15 : vector<120x64xf32>
    %cst_12 = arith.constant 1.000000e+00 : f32
    %17 = vector.broadcast %cst_12 : f32 to vector<120x64xf32>
    %18 = arith.subf %16, %17 : vector<120x64xf32>
    %19 = arith.select %13, %11, %18 : vector<120x64xi1>, vector<120x64xf32>
    %20 = arith.truncf %19 : vector<120x64xf32> to vector<120x64xbf16>
    %c0_13 = arith.constant 0 : index
    %c0_14 = arith.constant 0 : index
    %21 = vector.load %arg3[%c0_13, %c0_14] : memref<120x64xf32, #tpu.memory_space<vmem>>, vector<120x64xf32>
    %22 = arith.truncf %21 : vector<120x64xf32> to vector<120x64xbf16>
    %c0_15 = arith.constant 0 : index
    %c0_16 = arith.constant 0 : index
    %23 = vector.load %arg6[%c0_15, %c0_16] : memref<64x64xbf16, #tpu.memory_space<vmem>>, vector<64x64xbf16>
    %cst_17 = arith.constant dense<0.000000e+00> : vector<120x64xf32>
    %24 = tpu.matmul %20, %23, %cst_17 {dimension_numbers = #tpu.dot_dimension_numbers<[1], [0], [0], [1], [0, 0, 1, 1], [], []>} : vector<120x64xbf16>, vector<64x64xbf16>, vector<120x64xf32> -> vector<120x64xf32>
    %c0_18 = arith.constant 0 : index
    %c0_19 = arith.constant 0 : index
    %25 = vector.load %arg9[%c0_18, %c0_19] : memref<64x64xbf16, #tpu.memory_space<vmem>>, vector<64x64xbf16>
    %cst_20 = arith.constant dense<0.000000e+00> : vector<120x64xf32>
    %26 = tpu.matmul %22, %25, %cst_20 {dimension_numbers = #tpu.dot_dimension_numbers<[1], [0], [0], [1], [0, 0, 1, 1], [], []>} : vector<120x64xbf16>, vector<64x64xbf16>, vector<120x64xf32> -> vector<120x64xf32>
    %27 = arith.addf %24, %26 : vector<120x64xf32>
    %c0_21 = arith.constant 0 : index
    %c0_22 = arith.constant 0 : index
    %28 = vector.load %arg12[%c0_21, %c0_22] : memref<1x64xf32, #tpu.memory_space<vmem>>, vector<1x64xf32>
    %29 = vector.broadcast %28 : vector<1x64xf32> to vector<120x64xf32>
    %30 = arith.addf %27, %29 : vector<120x64xf32>
    %cst_23 = arith.constant 0.000000e+00 : f32
    %31 = vector.broadcast %cst_23 : f32 to vector<120x64xf32>
    %32 = arith.cmpf ogt, %30, %31 : vector<120x64xf32>
    %cst_24 = arith.constant 0.000000e+00 : f32
    %33 = vector.broadcast %cst_24 : f32 to vector<120x64xf32>
    %34 = arith.minimumf %30, %33 : vector<120x64xf32>
    %35 = math.exp %34 : vector<120x64xf32>
    %cst_25 = arith.constant 1.000000e+00 : f32
    %36 = vector.broadcast %cst_25 : f32 to vector<120x64xf32>
    %37 = arith.subf %35, %36 : vector<120x64xf32>
    %38 = arith.select %32, %30, %37 : vector<120x64xi1>, vector<120x64xf32>
    %39 = arith.truncf %38 : vector<120x64xf32> to vector<120x64xbf16>
    %c0_26 = arith.constant 0 : index
    %c0_27 = arith.constant 0 : index
    %40 = vector.load %arg4[%c0_26, %c0_27] : memref<120x64xf32, #tpu.memory_space<vmem>>, vector<120x64xf32>
    %41 = arith.truncf %40 : vector<120x64xf32> to vector<120x64xbf16>
    %c0_28 = arith.constant 0 : index
    %c0_29 = arith.constant 0 : index
    %42 = vector.load %arg7[%c0_28, %c0_29] : memref<64x128xbf16, #tpu.memory_space<vmem>>, vector<64x128xbf16>
    %cst_30 = arith.constant dense<0.000000e+00> : vector<120x128xf32>
    %43 = tpu.matmul %39, %42, %cst_30 {dimension_numbers = #tpu.dot_dimension_numbers<[1], [0], [0], [1], [0, 0, 1, 1], [], []>} : vector<120x64xbf16>, vector<64x128xbf16>, vector<120x128xf32> -> vector<120x128xf32>
    %c0_31 = arith.constant 0 : index
    %c0_32 = arith.constant 0 : index
    %44 = vector.load %arg10[%c0_31, %c0_32] : memref<64x128xbf16, #tpu.memory_space<vmem>>, vector<64x128xbf16>
    %cst_33 = arith.constant dense<0.000000e+00> : vector<120x128xf32>
    %45 = tpu.matmul %41, %44, %cst_33 {dimension_numbers = #tpu.dot_dimension_numbers<[1], [0], [0], [1], [0, 0, 1, 1], [], []>} : vector<120x64xbf16>, vector<64x128xbf16>, vector<120x128xf32> -> vector<120x128xf32>
    %46 = arith.addf %43, %45 : vector<120x128xf32>
    %c0_34 = arith.constant 0 : index
    %c0_35 = arith.constant 0 : index
    %47 = vector.load %arg13[%c0_34, %c0_35] : memref<1x128xf32, #tpu.memory_space<vmem>>, vector<1x128xf32>
    %48 = vector.broadcast %47 : vector<1x128xf32> to vector<120x128xf32>
    %49 = arith.addf %46, %48 : vector<120x128xf32>
    %cst_36 = arith.constant 0.000000e+00 : f32
    %50 = vector.broadcast %cst_36 : f32 to vector<120x128xf32>
    %51 = arith.cmpf ogt, %49, %50 : vector<120x128xf32>
    %cst_37 = arith.constant 0.000000e+00 : f32
    %52 = vector.broadcast %cst_37 : f32 to vector<120x128xf32>
    %53 = arith.minimumf %49, %52 : vector<120x128xf32>
    %54 = math.exp %53 : vector<120x128xf32>
    %cst_38 = arith.constant 1.000000e+00 : f32
    %55 = vector.broadcast %cst_38 : f32 to vector<120x128xf32>
    %56 = arith.subf %54, %55 : vector<120x128xf32>
    %57 = arith.select %51, %49, %56 : vector<120x128xi1>, vector<120x128xf32>
    %c0_39 = arith.constant 0 : index
    %c0_40 = arith.constant 0 : index
    %58 = vector.load %arg14[%c0_39, %c0_40] : memref<120x128xf32, #tpu.memory_space<vmem>>, vector<120x128xf32>
    tpu.vector_store %arg14[%c0_39, %c0_40], %57 {strides = array<i32>} : memref<120x128xf32, #tpu.memory_space<vmem>>, vector<120x128xf32>,
    return
  }
  func.func @transform_0(%arg0: i32) -> (i32, i32) {
    %c0_i32 = arith.constant 0 : i32
    %c0_i32_0 = arith.constant 0 : i32
    return %arg0, %c0_i32 : i32, i32
  }
  func.func @transform_1(%arg0: i32) -> (i32, i32) {
    %c0_i32 = arith.constant 0 : i32
    %c0_i32_0 = arith.constant 0 : i32
    return %arg0, %c0_i32 : i32, i32
  }
  func.func @transform_2(%arg0: i32) -> (i32, i32) {
    %c0_i32 = arith.constant 0 : i32
    %c0_i32_0 = arith.constant 0 : i32
    return %arg0, %c0_i32 : i32, i32
  }
  func.func @transform_3(%arg0: i32) -> (i32, i32) {
    %c0_i32 = arith.constant 0 : i32
    %c0_i32_0 = arith.constant 0 : i32
    return %arg0, %c0_i32 : i32, i32
  }
  func.func @transform_4(%arg0: i32) -> (i32, i32) {
    %c0_i32 = arith.constant 0 : i32
    %c0_i32_0 = arith.constant 0 : i32
    %c0_i32_1 = arith.constant 0 : i32
    return %c0_i32, %c0_i32_0 : i32, i32
  }
  func.func @transform_5(%arg0: i32) -> (i32, i32) {
    %c0_i32 = arith.constant 0 : i32
    %c0_i32_0 = arith.constant 0 : i32
    %c0_i32_1 = arith.constant 0 : i32
    return %c0_i32, %c0_i32_0 : i32, i32
  }
  func.func @transform_6(%arg0: i32) -> (i32, i32) {
    %c0_i32 = arith.constant 0 : i32
    %c0_i32_0 = arith.constant 0 : i32
    %c0_i32_1 = arith.constant 0 : i32
    return %c0_i32, %c0_i32_0 : i32, i32
  }
  func.func @transform_7(%arg0: i32) -> (i32, i32) {
    %c0_i32 = arith.constant 0 : i32
    %c0_i32_0 = arith.constant 0 : i32
    %c0_i32_1 = arith.constant 0 : i32
    return %c0_i32, %c0_i32_0 : i32, i32
  }
  func.func @transform_8(%arg0: i32) -> (i32, i32) {
    %c0_i32 = arith.constant 0 : i32
    %c0_i32_0 = arith.constant 0 : i32
    %c0_i32_1 = arith.constant 0 : i32
    return %c0_i32, %c0_i32_0 : i32, i32
  }
  func.func @transform_9(%arg0: i32) -> (i32, i32) {
    %c0_i32 = arith.constant 0 : i32
    %c0_i32_0 = arith.constant 0 : i32
    %c0_i32_1 = arith.constant 0 : i32
    return %c0_i32, %c0_i32_0 : i32, i32
  }
  func.func @transform_10(%arg0: i32) -> (i32, i32) {
    %c0_i32 = arith.constant 0 : i32
    %c0_i32_0 = arith.constant 0 : i32
    %c0_i32_1 = arith.constant 0 : i32
    return %c0_i32, %c0_i32_0 : i32, i32
  }
  func.func @transform_11(%arg0: i32) -> (i32, i32) {
    %c0_i32 = arith.constant 0 : i32
    %c0_i32_0 = arith.constant 0 : i32
    %c0_i32_1 = arith.constant 0 : i32
    return %c0_i32, %c0_i32_0 : i32, i32
  }
  func.func @transform_12(%arg0: i32) -> (i32, i32) {
    %c0_i32 = arith.constant 0 : i32
    %c0_i32_0 = arith.constant 0 : i32
    %c0_i32_1 = arith.constant 0 : i32
    return %c0_i32, %c0_i32_0 : i32, i32
  }
  func.func @transform_13(%arg0: i32) -> (i32, i32) {
    %c0_i32 = arith.constant 0 : i32
    %c0_i32_0 = arith.constant 0 : i32
    return %arg0, %c0_i32 : i32, i32
  }
}

</mosaic_0001>

<llo_original>
// kernel: tpu_custom_call.1
$region0: #{tpu_custom_call.1}
  #allocation0 [shape = 'u32[]', space=smem, size = 0x4, offset = 0x4, fixed_abs, tag = 'smem constant byte address 0x4 - core index']
  #allocation1 [shape = 'u32[144,128]{1,0:T(1,128)}', space=vmem, size = 0x12000, scoped, tag = 'internal scratch']
  %s0 = inlined_call_operand.vmem [shape: f32[240,64], index: 0, kind: input, shape index: {}]
  %s1 = inlined_call_operand.vmem [shape: f32[240,64], index: 1, kind: input, shape index: {}]
  %s2 = inlined_call_operand.vmem [shape: f32[240,64], index: 2, kind: input, shape index: {}]
  %s3 = inlined_call_operand.vmem [shape: f32[240,64], index: 3, kind: input, shape index: {}]
  %s4 = inlined_call_operand.vmem [shape: bf16[64,64], index: 4, kind: input, shape index: {}]
  %s5 = inlined_call_operand.vmem [shape: bf16[64,64], index: 5, kind: input, shape index: {}]
  %s6 = inlined_call_operand.vmem [shape: bf16[64,128], index: 6, kind: input, shape index: {}]
  %s7 = inlined_call_operand.vmem [shape: bf16[64,64], index: 7, kind: input, shape index: {}]
  %s8 = inlined_call_operand.vmem [shape: bf16[64,64], index: 8, kind: input, shape index: {}]
  %s9 = inlined_call_operand.vmem [shape: bf16[64,128], index: 9, kind: input, shape index: {}]
  %s10 = inlined_call_operand.vmem [shape: f32[1,64], index: 10, kind: input, shape index: {}]
  %s11 = inlined_call_operand.vmem [shape: f32[1,64], index: 11, kind: input, shape index: {}]
  %s12 = inlined_call_operand.vmem [shape: f32[1,128], index: 12, kind: input, shape index: {}]
  %s13 = inlined_call_operand.hbm [shape: f32[240,128], index: 13, kind: output, shape index: {}]
  %s14 = sld [smem:[#allocation0]]
  $region85: #{tpu_custom_call.1} parent=0
    _
  %s16 = ssub.s32 1, %s14
  %s17 = scalar_select 0, %s16, %s14
  $region1: #{tpu_custom_call.1} parent=0
    #allocation2 [shape = 'u8[122880]{0}', space=vmem, size = 0x1e000, scoped, tag = 'output window, operand 0']
    #allocation3 [shape = 's32[2]{0}', space=sflag, size = 0x8, scoped, tag = 'scoped memory for tpu_custom_call.1']
    %18 = vsyncpa [#allocation3], 0
    %s19 = scalar_lea.sflag [#allocation3], 1
    %20 = vsyncpa %s19, 0
    loop: start=0, step=1, limit=4
    $region2: #{tpu_custom_call.1} parent=1 // loop_pre_header
      _
    $region3: #{tpu_custom_call.1} parent=1 // loop_header
      %s22 = sphi 0, %s26
      %p23 = scmp.ge.s32.totalorder %s22, 4
      %s32 = sphi 0, %s34
      %s35 = sphi 0, %s32
      %s36 = sphi 0, %s35
      %s52 = sphi 0, %s36
      %s58 = sphi 0, %s60
      %s61 = sphi 0, %s58
      %s62 = sphi 0, %s61
      %s78 = sphi 0, %s62
      %s84 = sphi 0, %s86
      %s87 = sphi 0, %s84
      %s88 = sphi 0, %s87
      %s104 = sphi 0, %s88
      %s110 = sphi 0, %s112
      %s113 = sphi 0, %s110
      %s114 = sphi 0, %s113
      %s130 = sphi 0, %s114
      %s134 = sphi 0, %s134
      %s136 = sphi 0, %s134
      %s137 = sphi 0, %s136
      %s151 = sphi 0, %s137
      %s155 = sphi 0, %s155
      %s157 = sphi 0, %s155
      %s158 = sphi 0, %s157
      %s172 = sphi 0, %s158
      %s176 = sphi 0, %s176
      %s178 = sphi 0, %s176
      %s179 = sphi 0, %s178
      %s193 = sphi 0, %s179
      %s197 = sphi 0, %s197
      %s199 = sphi 0, %s197
      %s200 = sphi 0, %s199
      %s214 = sphi 0, %s200
      %s218 = sphi 0, %s218
      %s220 = sphi 0, %s218
      %s221 = sphi 0, %s220
      %s235 = sphi 0, %s221
      %s239 = sphi 0, %s239
      %s241 = sphi 0, %s239
      %s242 = sphi 0, %s241
      %s256 = sphi 0, %s242
      %s260 = sphi 0, %s260
      %s262 = sphi 0, %s260
      %s263 = sphi 0, %s262
      %s277 = sphi 0, %s263
      %s281 = sphi 0, %s281
      %s283 = sphi 0, %s281
      %s284 = sphi 0, %s283
      %s298 = sphi 0, %s284
      %s302 = sphi 0, %s302
      %s304 = sphi 0, %s302
      %s305 = sphi 0, %s304
      %s319 = sphi 0, %s305
      %s325 = sphi 0, %s327
      %s328 = sphi 0, %s325
      %s329 = sphi 0, %s328
      %s345 = sphi 0, %s329
    $region4: #{tpu_custom_call.1} parent=1 // loop_header_branch
      %25 = sbr.rel (%p23) target = $region8
    $region5: #{tpu_custom_call.1} parent=1 // loop_body
      %s27 = ssub.s32 %s22, 1
      %s28 = ssub.s32 %s22, 2
      %s29 = sadd.s32 %s22, 1
      %s30 = ssub.s32 %s22, %s29
      %p31 = scmp.eq.s32.totalorder %s30, 0
      %s33 = sadd.s32 %s32, 1
      %s34 = scalar_select %p31, %s32, %s33
      %p37 = pneg %p31
      %p38 = scmp.eq.s32.totalorder %s22, 1
      %p39 = por %p37, %p38
      %p40 = scmp.ne.s32.totalorder %s32, %s35
      %p41 = scmp.eq.s32.totalorder %s22, 0
      %p42 = por %p40, %p41
      %p43 = scmp.ne.s32.totalorder %s32, %s35
      %p44 = scmp.eq.s32.totalorder %s27, 1
      %p45 = por %p43, %p44
      %p46 = scmp.ne.s32.totalorder %s35, %s36
      %p47 = scmp.eq.s32.totalorder %s27, 0
      %p48 = por %p46, %p47
      %p49 = scmp.ne.s32.totalorder %s35, %s36
      %p50 = scmp.eq.s32.totalorder %s28, 1
      %p51 = por %p49, %p50
      %p53 = scmp.ne.s32.totalorder %s36, %s52
      %p54 = scmp.eq.s32.totalorder %s28, 0
      %p55 = por %p53, %p54
      %s56 = ssub.s32 %s22, %s29
      %p57 = scmp.eq.s32.totalorder %s56, 0
      %s59 = sadd.s32 %s58, 1
      %s60 = scalar_select %p57, %s58, %s59
      %p63 = pneg %p57
      %p64 = scmp.eq.s32.totalorder %s22, 1
      %p65 = por %p63, %p64
      %p66 = scmp.ne.s32.totalorder %s58, %s61
      %p67 = scmp.eq.s32.totalorder %s22, 0
      %p68 = por %p66, %p67
      %p69 = scmp.ne.s32.totalorder %s58, %s61
      %p70 = scmp.eq.s32.totalorder %s27, 1
      %p71 = por %p69, %p70
      %p72 = scmp.ne.s32.totalorder %s61, %s62
      %p73 = scmp.eq.s32.totalorder %s27, 0
      %p74 = por %p72, %p73
      %p75 = scmp.ne.s32.totalorder %s61, %s62
      %p76 = scmp.eq.s32.totalorder %s28, 1
      %p77 = por %p75, %p76
      %p79 = scmp.ne.s32.totalorder %s62, %s78
      %p80 = scmp.eq.s32.totalorder %s28, 0
      %p81 = por %p79, %p80
      %s82 = ssub.s32 %s22, %s29
      %p83 = scmp.eq.s32.totalorder %s82, 0
      %s85 = sadd.s32 %s84, 1
      %s86 = scalar_select %p83, %s84, %s85
      %p89 = pneg %p83
      %p90 = scmp.eq.s32.totalorder %s22, 1
      %p91 = por %p89, %p90
      %p92 = scmp.ne.s32.totalorder %s84, %s87
      %p93 = scmp.eq.s32.totalorder %s22, 0
      %p94 = por %p92, %p93
      %p95 = scmp.ne.s32.totalorder %s84, %s87
      %p96 = scmp.eq.s32.totalorder %s27, 1
      %p97 = por %p95, %p96
      %p98 = scmp.ne.s32.totalorder %s87, %s88
      %p99 = scmp.eq.s32.totalorder %s27, 0
      %p100 = por %p98, %p99
      %p101 = scmp.ne.s32.totalorder %s87, %s88
      %p102 = scmp.eq.s32.totalorder %s28, 1
      %p103 = por %p101, %p102
      %p105 = scmp.ne.s32.totalorder %s88, %s104
      %p106 = scmp.eq.s32.totalorder %s28, 0
      %p107 = por %p105, %p106
      %s108 = ssub.s32 %s22, %s29
      %p109 = scmp.eq.s32.totalorder %s108, 0
      %s111 = sadd.s32 %s110, 1
      %s112 = scalar_select %p109, %s110, %s111
      %p115 = pneg %p109
      %p116 = scmp.eq.s32.totalorder %s22, 1
      %p117 = por %p115, %p116
      %p118 = scmp.ne.s32.totalorder %s110, %s113
      %p119 = scmp.eq.s32.totalorder %s22, 0
      %p120 = por %p118, %p119
      %p121 = scmp.ne.s32.totalorder %s110, %s113
      %p122 = scmp.eq.s32.totalorder %s27, 1
      %p123 = por %p121, %p122
      %p124 = scmp.ne.s32.totalorder %s113, %s114
      %p125 = scmp.eq.s32.totalorder %s27, 0
      %p126 = por %p124, %p125
      %p127 = scmp.ne.s32.totalorder %s113, %s114
      %p128 = scmp.eq.s32.totalorder %s28, 1
      %p129 = por %p127, %p128
      %p131 = scmp.ne.s32.totalorder %s114, %s130
      %p132 = scmp.eq.s32.totalorder %s28, 0
      %p133 = por %p131, %p132
      %s135 = sadd.s32 %s134, 1
      %p138 = scmp.eq.s32.totalorder %s22, 1
      %p139 = scmp.ne.s32.totalorder %s134, %s136
      %p140 = scmp.eq.s32.totalorder %s22, 0
      %p141 = por %p139, %p140
      %p142 = scmp.ne.s32.totalorder %s134, %s136
      %p143 = scmp.eq.s32.totalorder %s27, 1
      %p144 = por %p142, %p143
      %p145 = scmp.ne.s32.totalorder %s136, %s137
      %p146 = scmp.eq.s32.totalorder %s27, 0
      %p147 = por %p145, %p146
      %p148 = scmp.ne.s32.totalorder %s136, %s137
      %p149 = scmp.eq.s32.totalorder %s28, 1
      %p150 = por %p148, %p149
      %p152 = scmp.ne.s32.totalorder %s137, %s151
      %p153 = scmp.eq.s32.totalorder %s28, 0
      %p154 = por %p152, %p153
      %s156 = sadd.s32 %s155, 1
      %p159 = scmp.eq.s32.totalorder %s22, 1
      %p160 = scmp.ne.s32.totalorder %s155, %s157
      %p161 = scmp.eq.s32.totalorder %s22, 0
      %p162 = por %p160, %p161
      %p163 = scmp.ne.s32.totalorder %s155, %s157
      %p164 = scmp.eq.s32.totalorder %s27, 1
      %p165 = por %p163, %p164
      %p166 = scmp.ne.s32.totalorder %s157, %s158
      %p167 = scmp.eq.s32.totalorder %s27, 0
      %p168 = por %p166, %p167
      %p169 = scmp.ne.s32.totalorder %s157, %s158
      %p170 = scmp.eq.s32.totalorder %s28, 1
      %p171 = por %p169, %p170
      %p173 = scmp.ne.s32.totalorder %s158, %s172
      %p174 = scmp.eq.s32.totalorder %s28, 0
      %p175 = por %p173, %p174
      %s177 = sadd.s32 %s176, 1
      %p180 = scmp.eq.s32.totalorder %s22, 1
      %p181 = scmp.ne.s32.totalorder %s176, %s178
      %p182 = scmp.eq.s32.totalorder %s22, 0
      %p183 = por %p181, %p182
      %p184 = scmp.ne.s32.totalorder %s176, %s178
      %p185 = scmp.eq.s32.totalorder %s27, 1
      %p186 = por %p184, %p185
      %p187 = scmp.ne.s32.totalorder %s178, %s179
      %p188 = scmp.eq.s32.totalorder %s27, 0
      %p189 = por %p187, %p188
      %p190 = scmp.ne.s32.totalorder %s178, %s179
      %p191 = scmp.eq.s32.totalorder %s28, 1
      %p192 = por %p190, %p191
      %p194 = scmp.ne.s32.totalorder %s179, %s193
      %p195 = scmp.eq.s32.totalorder %s28, 0
      %p196 = por %p194, %p195
      %s198 = sadd.s32 %s197, 1
      %p201 = scmp.eq.s32.totalorder %s22, 1
      %p202 = scmp.ne.s32.totalorder %s197, %s199
      %p203 = scmp.eq.s32.totalorder %s22, 0
      %p204 = por %p202, %p203
      %p205 = scmp.ne.s32.totalorder %s197, %s199
      %p206 = scmp.eq.s32.totalorder %s27, 1
      %p207 = por %p205, %p206
      %p208 = scmp.ne.s32.totalorder %s199, %s200
      %p209 = scmp.eq.s32.totalorder %s27, 0
      %p210 = por %p208, %p209
      %p211 = scmp.ne.s32.totalorder %s199, %s200
      %p212 = scmp.eq.s32.totalorder %s28, 1
      %p213 = por %p211, %p212
      %p215 = scmp.ne.s32.totalorder %s200, %s214
      %p216 = scmp.eq.s32.totalorder %s28, 0
      %p217 = por %p215, %p216
      %s219 = sadd.s32 %s218, 1
      %p222 = scmp.eq.s32.totalorder %s22, 1
      %p223 = scmp.ne.s32.totalorder %s218, %s220
      %p224 = scmp.eq.s32.totalorder %s22, 0
      %p225 = por %p223, %p224
      %p226 = scmp.ne.s32.totalorder %s218, %s220
      %p227 = scmp.eq.s32.totalorder %s27, 1
      %p228 = por %p226, %p227
      %p229 = scmp.ne.s32.totalorder %s220, %s221
      %p230 = scmp.eq.s32.totalorder %s27, 0
      %p231 = por %p229, %p230
      %p232 = scmp.ne.s32.totalorder %s220, %s221
      %p233 = scmp.eq.s32.totalorder %s28, 1
      %p234 = por %p232, %p233
      %p236 = scmp.ne.s32.totalorder %s221, %s235
      %p237 = scmp.eq.s32.totalorder %s28, 0
      %p238 = por %p236, %p237
      %s240 = sadd.s32 %s239, 1
      %p243 = scmp.eq.s32.totalorder %s22, 1
      %p244 = scmp.ne.s32.totalorder %s239, %s241
      %p245 = scmp.eq.s32.totalorder %s22, 0
      %p246 = por %p244, %p245
      %p247 = scmp.ne.s32.totalorder %s239, %s241
      %p248 = scmp.eq.s32.totalorder %s27, 1
      %p249 = por %p247, %p248
      %p250 = scmp.ne.s32.totalorder %s241, %s242
      %p251 = scmp.eq.s32.totalorder %s27, 0
      %p252 = por %p250, %p251
      %p253 = scmp.ne.s32.totalorder %s241, %s242
      %p254 = scmp.eq.s32.totalorder %s28, 1
      %p255 = por %p253, %p254
      %p257 = scmp.ne.s32.totalorder %s242, %s256
      %p258 = scmp.eq.s32.totalorder %s28, 0
      %p259 = por %p257, %p258
      %s261 = sadd.s32 %s260, 1
      %p264 = scmp.eq.s32.totalorder %s22, 1
      %p265 = scmp.ne.s32.totalorder %s260, %s262
      %p266 = scmp.eq.s32.totalorder %s22, 0
      %p267 = por %p265, %p266
      %p268 = scmp.ne.s32.totalorder %s260, %s262
      %p269 = scmp.eq.s32.totalorder %s27, 1
      %p270 = por %p268, %p269
      %p271 = scmp.ne.s32.totalorder %s262, %s263
      %p272 = scmp.eq.s32.totalorder %s27, 0
      %p273 = por %p271, %p272
      %p274 = scmp.ne.s32.totalorder %s262, %s263
      %p275 = scmp.eq.s32.totalorder %s28, 1
      %p276 = por %p274, %p275
      %p278 = scmp.ne.s32.totalorder %s263, %s277
      %p279 = scmp.eq.s32.totalorder %s28, 0
      %p280 = por %p278, %p279
      %s282 = sadd.s32 %s281, 1
      %p285 = scmp.eq.s32.totalorder %s22, 1
      %p286 = scmp.ne.s32.totalorder %s281, %s283
      %p287 = scmp.eq.s32.totalorder %s22, 0
      %p288 = por %p286, %p287
      %p289 = scmp.ne.s32.totalorder %s281, %s283
      %p290 = scmp.eq.s32.totalorder %s27, 1
      %p291 = por %p289, %p290
      %p292 = scmp.ne.s32.totalorder %s283, %s284
      %p293 = scmp.eq.s32.totalorder %s27, 0
      %p294 = por %p292, %p293
      %p295 = scmp.ne.s32.totalorder %s283, %s284
      %p296 = scmp.eq.s32.totalorder %s28, 1
      %p297 = por %p295, %p296
      %p299 = scmp.ne.s32.totalorder %s284, %s298
      %p300 = scmp.eq.s32.totalorder %s28, 0
      %p301 = por %p299, %p300
      %s303 = sadd.s32 %s302, 1
      %p306 = scmp.eq.s32.totalorder %s22, 1
      %p307 = scmp.ne.s32.totalorder %s302, %s304
      %p308 = scmp.eq.s32.totalorder %s22, 0
      %p309 = por %p307, %p308
      %p310 = scmp.ne.s32.totalorder %s302, %s304
      %p311 = scmp.eq.s32.totalorder %s27, 1
      %p312 = por %p310, %p311
      %p313 = scmp.ne.s32.totalorder %s304, %s305
      %p314 = scmp.eq.s32.totalorder %s27, 0
      %p315 = por %p313, %p314
      %p316 = scmp.ne.s32.totalorder %s304, %s305
      %p317 = scmp.eq.s32.totalorder %s28, 1
      %p318 = por %p316, %p317
      %p320 = scmp.ne.s32.totalorder %s305, %s319
      %p321 = scmp.eq.s32.totalorder %s28, 0
      %p322 = por %p320, %p321
      %s323 = ssub.s32 %s22, %s29
      %p324 = scmp.eq.s32.totalorder %s323, 0
      %s326 = sadd.s32 %s325, 1
      %s327 = scalar_select %p324, %s325, %s326
      %p330 = pneg %p324
      %p331 = scmp.eq.s32.totalorder %s22, 1
      %p332 = por %p330, %p331
      %p333 = scmp.ne.s32.totalorder %s325, %s328
      %p334 = scmp.eq.s32.totalorder %s22, 0
      %p335 = por %p333, %p334
      %p336 = scmp.ne.s32.totalorder %s325, %s328
      %p337 = scmp.eq.s32.totalorder %s27, 1
      %p338 = por %p336, %p337
      %p339 = scmp.ne.s32.totalorder %s328, %s329
      %p340 = scmp.eq.s32.totalorder %s27, 0
      %p341 = por %p339, %p340
      %p342 = scmp.ne.s32.totalorder %s328, %s329
      %p343 = scmp.eq.s32.totalorder %s28, 1
      %p344 = por %p342, %p343
      %p346 = scmp.ne.s32.totalorder %s329, %s345
      %p347 = scmp.eq.s32.totalorder %s28, 0
      %p348 = por %p346, %p347
      %p349 = scmp.le.s32.totalorder 1, %s22
      %p350 = scmp.lt.s32.totalorder %s22, 3
      %p351 = pnand %p349, %p350
      %p352 = pneg %p351
      // Predicated region
      $region9: #{tpu_custom_call.1} parent=5 // pred_check
        _
      $region10: #{tpu_custom_call.1} parent=5 // pred_check_branch
        %354 = sbr.rel (%p351) target = $region12
      $region11: #{tpu_custom_call.1} parent=5 // pred_region
        %s355 = ssub.s32 %s22, 1
        // Predicated region
        $region13: #{tpu_custom_call.1} parent=11 // pred_check
          %p356 = pneg %p147
        $region14: #{tpu_custom_call.1} parent=11 // pred_check_branch
          %358 = sbr.rel (%p356) target = $region16
        $region15: #{tpu_custom_call.1} parent=11 // pred_region
          _
        $region16: #{tpu_custom_call.1} parent=11 // pred_fallthru
          _
        // Predicated region
        $region17: #{tpu_custom_call.1} parent=11 // pred_check
          %p359 = pneg %p168
        $region18: #{tpu_custom_call.1} parent=11 // pred_check_branch
          %361 = sbr.rel (%p359) target = $region20
        $region19: #{tpu_custom_call.1} parent=11 // pred_region
          _
        $region20: #{tpu_custom_call.1} parent=11 // pred_fallthru
          _
        // Predicated region
        $region21: #{tpu_custom_call.1} parent=11 // pred_check
          %p362 = pneg %p189
        $region22: #{tpu_custom_call.1} parent=11 // pred_check_branch
          %364 = sbr.rel (%p362) target = $region24
        $region23: #{tpu_custom_call.1} parent=11 // pred_region
          _
        $region24: #{tpu_custom_call.1} parent=11 // pred_fallthru
          _
        // Predicated region
        $region25: #{tpu_custom_call.1} parent=11 // pred_check
          %p365 = pneg %p210
        $region26: #{tpu_custom_call.1} parent=11 // pred_check_branch
          %367 = sbr.rel (%p365) target = $region28
        $region27: #{tpu_custom_call.1} parent=11 // pred_region
          _
        $region28: #{tpu_custom_call.1} parent=11 // pred_fallthru
          _
        // Predicated region
        $region29: #{tpu_custom_call.1} parent=11 // pred_check
          %p368 = pneg %p231
        $region30: #{tpu_custom_call.1} parent=11 // pred_check_branch
          %370 = sbr.rel (%p368) target = $region32
        $region31: #{tpu_custom_call.1} parent=11 // pred_region
          _
        $region32: #{tpu_custom_call.1} parent=11 // pred_fallthru
          _
        // Predicated region
        $region33: #{tpu_custom_call.1} parent=11 // pred_check
          %p371 = pneg %p252
        $region34: #{tpu_custom_call.1} parent=11 // pred_check_branch
          %373 = sbr.rel (%p371) target = $region36
        $region35: #{tpu_custom_call.1} parent=11 // pred_region
          _
        $region36: #{tpu_custom_call.1} parent=11 // pred_fallthru
          _
        // Predicated region
        $region37: #{tpu_custom_call.1} parent=11 // pred_check
          %p374 = pneg %p273
        $region38: #{tpu_custom_call.1} parent=11 // pred_check_branch
          %376 = sbr.rel (%p374) target = $region40
        $region39: #{tpu_custom_call.1} parent=11 // pred_region
          _
        $region40: #{tpu_custom_call.1} parent=11 // pred_fallthru
          _
        // Predicated region
        $region41: #{tpu_custom_call.1} parent=11 // pred_check
          %p377 = pneg %p294
        $region42: #{tpu_custom_call.1} parent=11 // pred_check_branch
          %379 = sbr.rel (%p377) target = $region44
        $region43: #{tpu_custom_call.1} parent=11 // pred_region
          _
        $region44: #{tpu_custom_call.1} parent=11 // pred_fallthru
          _
        // Predicated region
        $region45: #{tpu_custom_call.1} parent=11 // pred_check
          %p380 = pneg %p315
        $region46: #{tpu_custom_call.1} parent=11 // pred_check_branch
          %382 = sbr.rel (%p380) target = $region48
        $region47: #{tpu_custom_call.1} parent=11 // pred_region
          _
        $region48: #{tpu_custom_call.1} parent=11 // pred_fallthru
          _
      $region12: #{tpu_custom_call.1} parent=5 // pred_fallthru
        _
      %p383 = scmp.lt.s32.totalorder %s22, 2
      // Predicated region
      $region49: #{tpu_custom_call.1} parent=5 // pred_check
        %p384 = pneg %p383
      $region50: #{tpu_custom_call.1} parent=5 // pred_check_branch
        %386 = sbr.rel (%p384) target = $region52
      $region51: #{tpu_custom_call.1} parent=5 // pred_region
        // Predicated region
        $region53: #{tpu_custom_call.1} parent=51 // pred_check
          %p387 = pneg %p42
        $region54: #{tpu_custom_call.1} parent=51 // pred_check_branch
          %389 = sbr.rel (%p387) target = $region56
        $region55: #{tpu_custom_call.1} parent=51 // pred_region
          %s390 = smul.u32 15, %s22
          %p391 = scmp.lt.s32.totalorder %s390, 29
          %s392 = scalar_select %p391, %s390, 29
          %s393 = smul.addr %s392, 8
          %s394 = scalar_lea.vmem %s0, %s393
          %s395 = smul.u32 15, %s22
        $region56: #{tpu_custom_call.1} parent=51 // pred_fallthru
          _
        // Predicated region
        $region57: #{tpu_custom_call.1} parent=51 // pred_check
          %p396 = pneg %p68
        $region58: #{tpu_custom_call.1} parent=51 // pred_check_branch
          %398 = sbr.rel (%p396) target = $region60
        $region59: #{tpu_custom_call.1} parent=51 // pred_region
          %s399 = smul.u32 15, %s22
          %p400 = scmp.lt.s32.totalorder %s399, 29
          %s401 = scalar_select %p400, %s399, 29
          %s402 = smul.addr %s401, 8
          %s403 = scalar_lea.vmem %s1, %s402
          %s404 = smul.u32 15, %s22
        $region60: #{tpu_custom_call.1} parent=51 // pred_fallthru
          _
        // Predicated region
        $region61: #{tpu_custom_call.1} parent=51 // pred_check
          %p405 = pneg %p94
        $region62: #{tpu_custom_call.1} parent=51 // pred_check_branch
          %407 = sbr.rel (%p405) target = $region64
        $region63: #{tpu_custom_call.1} parent=51 // pred_region
          %s408 = smul.u32 15, %s22
          %p409 = scmp.lt.s32.totalorder %s408, 29
          %s410 = scalar_select %p409, %s408, 29
          %s411 = smul.addr %s410, 8
          %s412 = scalar_lea.vmem %s2, %s411
          %s413 = smul.u32 15, %s22
        $region64: #{tpu_custom_call.1} parent=51 // pred_fallthru
          _
        // Predicated region
        $region65: #{tpu_custom_call.1} parent=51 // pred_check
          %p414 = pneg %p120
        $region66: #{tpu_custom_call.1} parent=51 // pred_check_branch
          %416 = sbr.rel (%p414) target = $region68
        $region67: #{tpu_custom_call.1} parent=51 // pred_region
          %s417 = smul.u32 15, %s22
          %p418 = scmp.lt.s32.totalorder %s417, 29
          %s419 = scalar_select %p418, %s417, 29
          %s420 = smul.addr %s419, 8
          %s421 = scalar_lea.vmem %s3, %s420
          %s422 = smul.u32 15, %s22
        $region68: #{tpu_custom_call.1} parent=51 // pred_fallthru
          _
      $region52: #{tpu_custom_call.1} parent=5 // pred_fallthru
        _
      %p423 = scmp.le.s32.totalorder 1, %s22
      %p424 = scmp.lt.s32.totalorder %s22, 3
      %p425 = pnand %p423, %p424
      %p426 = pneg %p425
      // Predicated region
      $region69: #{tpu_custom_call.1} parent=5 // pred_check
        _
      $region70: #{tpu_custom_call.1} parent=5 // pred_check_branch
        %428 = sbr.rel (%p425) target = $region72
      $region71: #{tpu_custom_call.1} parent=5 // pred_region
        %s429 = ssub.s32 %s22, 1
        %s430 = smul.u32 15, %s27
        %p431 = scmp.lt.s32.totalorder %s430, 29
        %s432 = scalar_select %p431, %s430, 29
        %s433 = smul.addr %s432, 8
        %s434 = scalar_lea.vmem %s0, %s433
        %p435 = pneg %p48
        %p436 = pneg %p45
        %s437 = smul.u32 15, %s27
        %p438 = scmp.lt.s32.totalorder %s437, 29
        %s439 = scalar_select %p438, %s437, 29
        %s440 = smul.addr %s439, 8
        %s441 = scalar_lea.vmem %s1, %s440
        %p442 = pneg %p74
        %p443 = pneg %p71
        %s444 = smul.u32 15, %s27
        %p445 = scmp.lt.s32.totalorder %s444, 29
        %s446 = scalar_select %p445, %s444, 29
        %s447 = smul.addr %s446, 8
        %s448 = scalar_lea.vmem %s2, %s447
        %p449 = pneg %p100
        %p450 = pneg %p97
        %s451 = smul.u32 15, %s27
        %p452 = scmp.lt.s32.totalorder %s451, 29
        %s453 = scalar_select %p452, %s451, 29
        %s454 = smul.addr %s453, 8
        %s455 = scalar_lea.vmem %s3, %s454
        %p456 = pneg %p126
        %p457 = pneg %p123
        %p458 = pneg %p147
        %p459 = pneg %p144
        %p460 = pneg %p168
        %p461 = pneg %p165
        %p462 = pneg %p189
        %p463 = pneg %p186
        %p464 = pneg %p210
        %p465 = pneg %p207
        %p466 = pneg %p231
        %p467 = pneg %p228
        %p468 = pneg %p252
        %p469 = pneg %p249
        %p470 = pneg %p273
        %p471 = pneg %p270
        %p472 = pneg %p294
        %p473 = pneg %p291
        %p474 = pneg %p315
        %p475 = pneg %p312
        %p476 = pneg %p341
        %p477 = pneg %p338
        %s478 = sand.u32 %s328, 1
        %s479 = scalar_lea.sflag [#allocation3], %s478
        %s480 = sand.u32 %s328, 1
        %s481 = smul.addr %s480, 120
        %s482 = scalar_lea.vmem [#allocation2], %s481
        %s483 = smul.u32 15, %s27
        %p484 = scmp.lt.s32.totalorder %s483, 29
        %s485 = scalar_select %p484, %s483, 29
        %s486 = smul.addr %s485, 8
        %s487 = scalar_lea.vmem %s0, %s486
        %s488 = smul.u32 15, %s27
        %s489 = smul.u32 15, %s27
        %p490 = scmp.lt.s32.totalorder %s489, 29
        %s491 = scalar_select %p490, %s489, 29
        %s492 = smul.addr %s491, 8
        %s493 = scalar_lea.vmem %s1, %s492
        %s494 = smul.u32 15, %s27
        %s495 = smul.u32 15, %s27
        %p496 = scmp.lt.s32.totalorder %s495, 29
        %s497 = scalar_select %p496, %s495, 29
        %s498 = smul.addr %s497, 8
        %s499 = scalar_lea.vmem %s2, %s498
        %s500 = smul.u32 15, %s27
        %s501 = smul.u32 15, %s27
        %p502 = scmp.lt.s32.totalorder %s501, 29
        %s503 = scalar_select %p502, %s501, 29
        %s504 = smul.addr %s503, 8
        %s505 = scalar_lea.vmem %s3, %s504
        %s506 = smul.u32 15, %s27
        %s507 = smul.u32 15, %s27
        %v509 = vld [vmem:[%s487] sm:$0xff]
        %v510 = vld [vmem:[%s487 + $0x8] sm:$0xff]
        %v511 = vld [vmem:[%s487 + $0x10] sm:$0xff]
        %v512 = vld [vmem:[%s487 + $0x18] sm:$0xff]
        %v513 = vld [vmem:[%s487 + $0x20] sm:$0xff]
        %v514 = vld [vmem:[%s487 + $0x28] sm:$0xff]
        %v515 = vld [vmem:[%s487 + $0x30] sm:$0xff]
        %v516 = vld [vmem:[%s487 + $0x38] sm:$0xff]
        %v517 = vld [vmem:[%s487 + $0x40] sm:$0xff]
        %v518 = vld [vmem:[%s487 + $0x48] sm:$0xff]
        %v519 = vld [vmem:[%s487 + $0x50] sm:$0xff]
        %v520 = vld [vmem:[%s487 + $0x58] sm:$0xff]
        %v521 = vld [vmem:[%s487 + $0x60] sm:$0xff]
        %v522 = vld [vmem:[%s487 + $0x68] sm:$0xff]
        %v523 = vld [vmem:[%s487 + $0x70] sm:$0xff]
        %v524 = vpack.c.bf16 %v510, %v509
        %v525 = vpack.c.bf16 %v512, %v511
        %v526 = vpack.c.bf16 %v514, %v513
        %v527 = vpack.c.bf16 %v516, %v515
        %v528 = vpack.c.bf16 %v518, %v517
        %v529 = vpack.c.bf16 %v520, %v519
        %v530 = vpack.c.bf16 %v522, %v521
        %v531 = vpack.c.bf16 %v523, %v523
        %v532 = vld [vmem:[%s493] sm:$0xff]
        %v533 = vld [vmem:[%s493 + $0x8] sm:$0xff]
        %v534 = vld [vmem:[%s493 + $0x10] sm:$0xff]
        %v535 = vld [vmem:[%s493 + $0x18] sm:$0xff]
        %v536 = vld [vmem:[%s493 + $0x20] sm:$0xff]
        %v537 = vld [vmem:[%s493 + $0x28] sm:$0xff]
        %v538 = vld [vmem:[%s493 + $0x30] sm:$0xff]
        %v539 = vld [vmem:[%s493 + $0x38] sm:$0xff]
        %v540 = vld [vmem:[%s493 + $0x40] sm:$0xff]
        %v541 = vld [vmem:[%s493 + $0x48] sm:$0xff]
        %v542 = vld [vmem:[%s493 + $0x50] sm:$0xff]
        %v543 = vld [vmem:[%s493 + $0x58] sm:$0xff]
        %v544 = vld [vmem:[%s493 + $0x60] sm:$0xff]
        %v545 = vld [vmem:[%s493 + $0x68] sm:$0xff]
        %v546 = vld [vmem:[%s493 + $0x70] sm:$0xff]
        %v547 = vpack.c.bf16 %v533, %v532
        %v548 = vpack.c.bf16 %v535, %v534
        %v549 = vpack.c.bf16 %v537, %v536
        %v550 = vpack.c.bf16 %v539, %v538
        %v551 = vpack.c.bf16 %v541, %v540
        %v552 = vpack.c.bf16 %v543, %v542
        %v553 = vpack.c.bf16 %v545, %v544
        %v554 = vpack.c.bf16 %v546, %v546
        %v555 = vld [vmem:[%s4] sm:$0xf]
        %v556 = vld [vmem:[%s4 + $0x4] sm:$0xf]
        %v557 = vld [vmem:[%s4 + $0x8] sm:$0xf]
        %v558 = vld [vmem:[%s4 + $0xc] sm:$0xf]
        %v559 = vld [vmem:[%s4 + $0x10] sm:$0xf]
        %v560 = vld [vmem:[%s4 + $0x14] sm:$0xf]
        %v561 = vld [vmem:[%s4 + $0x18] sm:$0xf]
        %v562 = vld [vmem:[%s4 + $0x1c] sm:$0xf]
        %v563 = vld [vmem:[%s7] sm:$0xf]
        %v564 = vld [vmem:[%s7 + $0x4] sm:$0xf]
        %v565 = vld [vmem:[%s7 + $0x8] sm:$0xf]
        %v566 = vld [vmem:[%s7 + $0xc] sm:$0xf]
        %v567 = vld [vmem:[%s7 + $0x10] sm:$0xf]
        %v568 = vld [vmem:[%s7 + $0x14] sm:$0xf]
        %v569 = vld [vmem:[%s7 + $0x18] sm:$0xf]
        %v570 = vld [vmem:[%s7 + $0x1c] sm:$0xf]
        %v579 = vunpack.c.l.b16 %v563
        %v580 = vunpack.c.l.b16 %v564
        %v581 = vunpack.c.l.b16 %v565
        %v582 = vunpack.c.l.b16 %v566
        %v583 = vunpack.c.l.b16 %v567
        %v584 = vunpack.c.l.b16 %v568
        %v585 = vunpack.c.l.b16 %v569
        %v586 = vunpack.c.l.b16 %v570
        %v587 = vpack.c.b16 %v580, %v579
        %v588 = vpack.c.b16 %v582, %v581
        %v589 = vpack.c.b16 %v584, %v583
        %v590 = vpack.c.b16 %v586, %v585
        %vm595 = vcmask 523264
        %v597 = vsel %vm595, %v547, 0
        %v600 = vsel %vm595, %v548, 0
        %v603 = vsel %vm595, %v549, 0
        %v606 = vsel %vm595, %v550, 0
        %v609 = vsel %vm595, %v551, 0
        %v612 = vsel %vm595, %v552, 0
        %v615 = vsel %vm595, %v553, 0
        %v618 = vsel %vm595, %v554, 0
        %620 = vmatprep.subr.bf16.mxu0 0
        %621 = vmatpush1.bf16.msra.mxu0 0
        %622 = vmatprep.subr.bf16.mxu0 0
        %623 = vmatpush1.bf16.msra.mxu0 0
        %624 = vmatprep.subr.bf16.mxu0 0
        %625 = vmatpush1.bf16.msra.mxu0 0
        %626 = vmatprep.subr.bf16.mxu0 0
        %627 = vmatpush1.bf16.msra.mxu0 0
        %628 = vmatprep.subr.bf16.mxu0 0
        %629 = vmatpush1.bf16.msra.mxu0 %v590
        %630 = vmatprep.subr.bf16.mxu0 0
        %631 = vmatpush1.bf16.msra.mxu0 %v589
        %632 = vmatprep.subr.bf16.mxu0 0
        %633 = vmatpush1.bf16.msra.mxu0 %v588
        %634 = vmatprep.subr.bf16.mxu0 0
        %635 = vmatpush1.bf16.msra.mxu0 %v587
        %636 = vmatprep.subr.bf16.mxu0 0
        %637 = vmatpush2.bf16.msra.mxu0 0
        %638 = vmatprep.subr.bf16.mxu0 0
        %639 = vmatpush2.bf16.msra.mxu0 0
        %640 = vmatprep.subr.bf16.mxu0 0
        %641 = vmatpush2.bf16.msra.mxu0 0
        %642 = vmatprep.subr.bf16.mxu0 0
        %643 = vmatpush2.bf16.msra.mxu0 0
        %644 = vmatprep.subr.bf16.mxu0 0
        %645 = vmatpush2.bf16.msra.mxu0 0
        %646 = vmatprep.subr.bf16.mxu0 0
        %647 = vmatpush2.bf16.msra.mxu0 0
        %648 = vmatprep.subr.bf16.mxu0 0
        %649 = vmatpush2.bf16.msra.mxu0 0
        %650 = vmatprep.subr.bf16.mxu0 0
        %651 = vmatpush2.bf16.msra.mxu0 0
        %652 = vmatprep.mubr.bf16.mxu0 0
        %653 = vmatmul.mubr.bf16.gmra.mxu0 %v597
        %v654 = vpop.f32.mrf.mxu0
        %v655 = vadd.f32 0.0, %v654
        %v656 = vpop.f32.mrf.mxu0
        %v657 = vpop.f32.mrf.mxu0
        %v658 = vadd.f32 0.0, %v657
        %v659 = vpop.f32.mrf.mxu0
        %660 = vmatprep.mubr.bf16.mxu0 0
        %661 = vmatmul.mubr.bf16.gmra.mxu0 %v600
        %v662 = vpop.f32.mrf.mxu0
        %v663 = vadd.f32 0.0, %v662
        %v664 = vpop.f32.mrf.mxu0
        %v665 = vpop.f32.mrf.mxu0
        %v666 = vadd.f32 0.0, %v665
        %v667 = vpop.f32.mrf.mxu0
        %668 = vmatprep.mubr.bf16.mxu0 0
        %669 = vmatmul.mubr.bf16.gmra.mxu0 %v603
        %v670 = vpop.f32.mrf.mxu0
        %v671 = vadd.f32 0.0, %v670
        %v672 = vpop.f32.mrf.mxu0
        %v673 = vpop.f32.mrf.mxu0
        %v674 = vadd.f32 0.0, %v673
        %v675 = vpop.f32.mrf.mxu0
        %676 = vmatprep.mubr.bf16.mxu0 0
        %677 = vmatmul.mubr.bf16.gmra.mxu0 %v606
        %v678 = vpop.f32.mrf.mxu0
        %v679 = vadd.f32 0.0, %v678
        %v680 = vpop.f32.mrf.mxu0
        %v681 = vpop.f32.mrf.mxu0
        %v682 = vadd.f32 0.0, %v681
        %v683 = vpop.f32.mrf.mxu0
        %684 = vmatprep.mubr.bf16.mxu0 0
        %685 = vmatmul.mubr.bf16.gmra.mxu0 %v609
        %v686 = vpop.f32.mrf.mxu0
        %v687 = vadd.f32 0.0, %v686
        %v688 = vpop.f32.mrf.mxu0
        %v689 = vpop.f32.mrf.mxu0
        %v690 = vadd.f32 0.0, %v689
        %v691 = vpop.f32.mrf.mxu0
        %692 = vmatprep.mubr.bf16.mxu0 0
        %693 = vmatmul.mubr.bf16.gmra.mxu0 %v612
        %v694 = vpop.f32.mrf.mxu0
        %v695 = vadd.f32 0.0, %v694
        %v696 = vpop.f32.mrf.mxu0
        %v697 = vpop.f32.mrf.mxu0
        %v698 = vadd.f32 0.0, %v697
        %v699 = vpop.f32.mrf.mxu0
        %700 = vmatprep.mubr.bf16.mxu0 0
        %701 = vmatmul.mubr.bf16.gmra.mxu0 %v615
        %v702 = vpop.f32.mrf.mxu0
        %v703 = vadd.f32 0.0, %v702
        %v704 = vpop.f32.mrf.mxu0
        %v705 = vpop.f32.mrf.mxu0
        %v706 = vadd.f32 0.0, %v705
        %v707 = vpop.f32.mrf.mxu0
        %708 = vmatprep.mubr.bf16.mxu0 0
        %709 = vmatmul.mubr.bf16.gmra.mxu0 %v618
        %v710 = vpop.f32.mrf.mxu0
        %v711 = vadd.f32 0.0, %v710
        %v712 = vpop.f32.mrf.mxu0
        %v713 = vpop.f32.mrf.mxu0
        %v714 = vpop.f32.mrf.mxu0
        %715 = vdwg.mxu0
        %v724 = vunpack.c.l.b16 %v555
        %v725 = vunpack.c.l.b16 %v556
        %v726 = vunpack.c.l.b16 %v557
        %v727 = vunpack.c.l.b16 %v558
        %v728 = vunpack.c.l.b16 %v559
        %v729 = vunpack.c.l.b16 %v560
        %v730 = vunpack.c.l.b16 %v561
        %v731 = vunpack.c.l.b16 %v562
        %v732 = vpack.c.b16 %v725, %v724
        %v733 = vpack.c.b16 %v727, %v726
        %v734 = vpack.c.b16 %v729, %v728
        %v735 = vpack.c.b16 %v731, %v730
        %v741 = vsel %vm595, %v524, 0
        %v744 = vsel %vm595, %v525, 0
        %v747 = vsel %vm595, %v526, 0
        %v750 = vsel %vm595, %v527, 0
        %v753 = vsel %vm595, %v528, 0
        %v756 = vsel %vm595, %v529, 0
        %v759 = vsel %vm595, %v530, 0
        %v762 = vsel %vm595, %v531, 0
        %764 = vmatprep.subr.bf16.mxu0 0
        %765 = vmatpush1.bf16.msra.mxu0 0
        %766 = vmatprep.subr.bf16.mxu0 0
        %767 = vmatpush1.bf16.msra.mxu0 0
        %768 = vmatprep.subr.bf16.mxu0 0
        %769 = vmatpush1.bf16.msra.mxu0 0
        %770 = vmatprep.subr.bf16.mxu0 0
        %771 = vmatpush1.bf16.msra.mxu0 0
        %772 = vmatprep.subr.bf16.mxu0 0
        %773 = vmatpush1.bf16.msra.mxu0 %v735
        %774 = vmatprep.subr.bf16.mxu0 0
        %775 = vmatpush1.bf16.msra.mxu0 %v734
        %776 = vmatprep.subr.bf16.mxu0 0
        %777 = vmatpush1.bf16.msra.mxu0 %v733
        %778 = vmatprep.subr.bf16.mxu0 0
        %779 = vmatpush1.bf16.msra.mxu0 %v732
        %780 = vmatprep.subr.bf16.mxu0 0
        %781 = vmatpush2.bf16.msra.mxu0 0
        %782 = vmatprep.subr.bf16.mxu0 0
        %783 = vmatpush2.bf16.msra.mxu0 0
        %784 = vmatprep.subr.bf16.mxu0 0
        %785 = vmatpush2.bf16.msra.mxu0 0
        %786 = vmatprep.subr.bf16.mxu0 0
        %787 = vmatpush2.bf16.msra.mxu0 0
        %788 = vmatprep.subr.bf16.mxu0 0
        %789 = vmatpush2.bf16.msra.mxu0 0
        %790 = vmatprep.subr.bf16.mxu0 0
        %791 = vmatpush2.bf16.msra.mxu0 0
        %792 = vmatprep.subr.bf16.mxu0 0
        %793 = vmatpush2.bf16.msra.mxu0 0
        %794 = vmatprep.subr.bf16.mxu0 0
        %795 = vmatpush2.bf16.msra.mxu0 0
        %796 = vmatprep.mubr.bf16.mxu0 0
        %797 = vmatmul.mubr.bf16.gmra.mxu0 %v741
        %v798 = vpop.f32.mrf.mxu0
        %v799 = vadd.f32 %v655, %v798
        %v800 = vpop.f32.mrf.mxu0
        %v801 = vpop.f32.mrf.mxu0
        %v802 = vadd.f32 %v658, %v801
        %v803 = vpop.f32.mrf.mxu0
        %804 = vmatprep.mubr.bf16.mxu0 0
        %805 = vmatmul.mubr.bf16.gmra.mxu0 %v744
        %v806 = vpop.f32.mrf.mxu0
        %v807 = vadd.f32 %v663, %v806
        %v808 = vpop.f32.mrf.mxu0
        %v809 = vpop.f32.mrf.mxu0
        %v810 = vadd.f32 %v666, %v809
        %v811 = vpop.f32.mrf.mxu0
        %812 = vmatprep.mubr.bf16.mxu0 0
        %813 = vmatmul.mubr.bf16.gmra.mxu0 %v747
        %v814 = vpop.f32.mrf.mxu0
        %v815 = vadd.f32 %v671, %v814
        %v816 = vpop.f32.mrf.mxu0
        %v817 = vpop.f32.mrf.mxu0
        %v818 = vadd.f32 %v674, %v817
        %v819 = vpop.f32.mrf.mxu0
        %820 = vmatprep.mubr.bf16.mxu0 0
        %821 = vmatmul.mubr.bf16.gmra.mxu0 %v750
        %v822 = vpop.f32.mrf.mxu0
        %v823 = vadd.f32 %v679, %v822
        %v824 = vpop.f32.mrf.mxu0
        %v825 = vpop.f32.mrf.mxu0
        %v826 = vadd.f32 %v682, %v825
        %v827 = vpop.f32.mrf.mxu0
        %828 = vmatprep.mubr.bf16.mxu0 0
        %829 = vmatmul.mubr.bf16.gmra.mxu0 %v753
        %v830 = vpop.f32.mrf.mxu0
        %v831 = vadd.f32 %v687, %v830
        %v832 = vpop.f32.mrf.mxu0
        %v833 = vpop.f32.mrf.mxu0
        %v834 = vadd.f32 %v690, %v833
        %v835 = vpop.f32.mrf.mxu0
        %836 = vmatprep.mubr.bf16.mxu0 0
        %837 = vmatmul.mubr.bf16.gmra.mxu0 %v756
        %v838 = vpop.f32.mrf.mxu0
        %v839 = vadd.f32 %v695, %v838
        %v840 = vpop.f32.mrf.mxu0
        %v841 = vpop.f32.mrf.mxu0
        %v842 = vadd.f32 %v698, %v841
        %v843 = vpop.f32.mrf.mxu0
        %844 = vmatprep.mubr.bf16.mxu0 0
        %845 = vmatmul.mubr.bf16.gmra.mxu0 %v759
        %v846 = vpop.f32.mrf.mxu0
        %v847 = vadd.f32 %v703, %v846
        %v848 = vpop.f32.mrf.mxu0
        %v849 = vpop.f32.mrf.mxu0
        %v850 = vadd.f32 %v706, %v849
        %v851 = vpop.f32.mrf.mxu0
        %852 = vmatprep.mubr.bf16.mxu0 0
        %853 = vmatmul.mubr.bf16.gmra.mxu0 %v762
        %v854 = vpop.f32.mrf.mxu0
        %v855 = vadd.f32 %v711, %v854
        %v856 = vpop.f32.mrf.mxu0
        %v857 = vpop.f32.mrf.mxu0
        %v858 = vpop.f32.mrf.mxu0
        %859 = vdwg.mxu0
        %v860 = vld [vmem:[%s10] sm:$0x1]
        %v862 = vlaneseq
        %v863 = vshrl.u32 %v862, 7
        %v864 = vsub.s32 0, %v863
        %v865 = vrot.slane %v860, %v864
        %v867 = vadd.f32 %v799, %v865
        %v868 = vadd.f32 %v802, %v865
        %v869 = vadd.f32 %v807, %v865
        %v870 = vadd.f32 %v810, %v865
        %v871 = vadd.f32 %v815, %v865
        %v872 = vadd.f32 %v818, %v865
        %v873 = vadd.f32 %v823, %v865
        %v874 = vadd.f32 %v826, %v865
        %v875 = vadd.f32 %v831, %v865
        %v876 = vadd.f32 %v834, %v865
        %v877 = vadd.f32 %v839, %v865
        %v878 = vadd.f32 %v842, %v865
        %v879 = vadd.f32 %v847, %v865
        %v880 = vadd.f32 %v850, %v865
        %v881 = vadd.f32 %v855, %v865
        %vm882 = vcmp.gt.f32.partialorder %v867, 0.0
        %vm883 = vcmp.gt.f32.partialorder %v868, 0.0
        %vm884 = vcmp.gt.f32.partialorder %v869, 0.0
        %vm885 = vcmp.gt.f32.partialorder %v870, 0.0
        %vm886 = vcmp.gt.f32.partialorder %v871, 0.0
        %vm887 = vcmp.gt.f32.partialorder %v872, 0.0
        %vm888 = vcmp.gt.f32.partialorder %v873, 0.0
        %vm889 = vcmp.gt.f32.partialorder %v874, 0.0
        %vm890 = vcmp.gt.f32.partialorder %v875, 0.0
        %vm891 = vcmp.gt.f32.partialorder %v876, 0.0
        %vm892 = vcmp.gt.f32.partialorder %v877, 0.0
        %vm893 = vcmp.gt.f32.partialorder %v878, 0.0
        %vm894 = vcmp.gt.f32.partialorder %v879, 0.0
        %vm895 = vcmp.gt.f32.partialorder %v880, 0.0
        %vm896 = vcmp.gt.f32.partialorder %v881, 0.0
        %v897 = vmin.f32 %v867, 0.0
        %v898 = vmin.f32 %v868, 0.0
        %v899 = vmin.f32 %v869, 0.0
        %v900 = vmin.f32 %v870, 0.0
        %v901 = vmin.f32 %v871, 0.0
        %v902 = vmin.f32 %v872, 0.0
        %v903 = vmin.f32 %v873, 0.0
        %v904 = vmin.f32 %v874, 0.0
        %v905 = vmin.f32 %v875, 0.0
        %v906 = vmin.f32 %v876, 0.0
        %v907 = vmin.f32 %v877, 0.0
        %v908 = vmin.f32 %v878, 0.0
        %v909 = vmin.f32 %v879, 0.0
        %v910 = vmin.f32 %v880, 0.0
        %v911 = vmin.f32 %v881, 0.0
        %v912 = vmul.f32 %v897, 1.442695
        %v913 = vpow.pop %v912
        %v914 = vmul.f32 %v898, 1.442695
        %v915 = vpow.pop %v914
        %v916 = vmul.f32 %v899, 1.442695
        %v917 = vpow.pop %v916
        %v918 = vmul.f32 %v900, 1.442695
        %v919 = vpow.pop %v918
        %v920 = vmul.f32 %v901, 1.442695
        %v921 = vpow.pop %v920
        %v922 = vmul.f32 %v902, 1.442695
        %v923 = vpow.pop %v922
        %v924 = vmul.f32 %v903, 1.442695
        %v925 = vpow.pop %v924
        %v926 = vmul.f32 %v904, 1.442695
        %v927 = vpow.pop %v926
        %v928 = vmul.f32 %v905, 1.442695
        %v929 = vpow.pop %v928
        %v930 = vmul.f32 %v906, 1.442695
        %v931 = vpow.pop %v930
        %v932 = vmul.f32 %v907, 1.442695
        %v933 = vpow.pop %v932
        %v934 = vmul.f32 %v908, 1.442695
        %v935 = vpow.pop %v934
        %v936 = vmul.f32 %v909, 1.442695
        %v937 = vpow.pop %v936
        %v938 = vmul.f32 %v910, 1.442695
        %v939 = vpow.pop %v938
        %v940 = vmul.f32 %v911, 1.442695
        %v941 = vpow.pop %v940
        %v942 = vsub.f32 %v913, 1.0
        %v943 = vsub.f32 %v915, 1.0
        %v944 = vsub.f32 %v917, 1.0
        %v945 = vsub.f32 %v919, 1.0
        %v946 = vsub.f32 %v921, 1.0
        %v947 = vsub.f32 %v923, 1.0
        %v948 = vsub.f32 %v925, 1.0
        %v949 = vsub.f32 %v927, 1.0
        %v950 = vsub.f32 %v929, 1.0
        %v951 = vsub.f32 %v931, 1.0
        %v952 = vsub.f32 %v933, 1.0
        %v953 = vsub.f32 %v935, 1.0
        %v954 = vsub.f32 %v937, 1.0
        %v955 = vsub.f32 %v939, 1.0
        %v956 = vsub.f32 %v941, 1.0
        %v957 = vsel %vm882, %v867, %v942
        %v958 = vsel %vm883, %v868, %v943
        %v959 = vsel %vm884, %v869, %v944
        %v960 = vsel %vm885, %v870, %v945
        %v961 = vsel %vm886, %v871, %v946
        %v962 = vsel %vm887, %v872, %v947
        %v963 = vsel %vm888, %v873, %v948
        %v964 = vsel %vm889, %v874, %v949
        %v965 = vsel %vm890, %v875, %v950
        %v966 = vsel %vm891, %v876, %v951
        %v967 = vsel %vm892, %v877, %v952
        %v968 = vsel %vm893, %v878, %v953
        %v969 = vsel %vm894, %v879, %v954
        %v970 = vsel %vm895, %v880, %v955
        %v971 = vsel %vm896, %v881, %v956
        %v972 = vpack.c.bf16 %v958, %v957
        %v973 = vpack.c.bf16 %v960, %v959
        %v974 = vpack.c.bf16 %v962, %v961
        %v975 = vpack.c.bf16 %v964, %v963
        %v976 = vpack.c.bf16 %v966, %v965
        %v977 = vpack.c.bf16 %v968, %v967
        %v978 = vpack.c.bf16 %v970, %v969
        %v979 = vpack.c.bf16 %v971, %v971
        %v980 = vld [vmem:[%s499] sm:$0xff]
        %v981 = vld [vmem:[%s499 + $0x8] sm:$0xff]
        %v982 = vld [vmem:[%s499 + $0x10] sm:$0xff]
        %v983 = vld [vmem:[%s499 + $0x18] sm:$0xff]
        %v984 = vld [vmem:[%s499 + $0x20] sm:$0xff]
        %v985 = vld [vmem:[%s499 + $0x28] sm:$0xff]
        %v986 = vld [vmem:[%s499 + $0x30] sm:$0xff]
        %v987 = vld [vmem:[%s499 + $0x38] sm:$0xff]
        %v988 = vld [vmem:[%s499 + $0x40] sm:$0xff]
        %v989 = vld [vmem:[%s499 + $0x48] sm:$0xff]
        %v990 = vld [vmem:[%s499 + $0x50] sm:$0xff]
        %v991 = vld [vmem:[%s499 + $0x58] sm:$0xff]
        %v992 = vld [vmem:[%s499 + $0x60] sm:$0xff]
        %v993 = vld [vmem:[%s499 + $0x68] sm:$0xff]
        %v994 = vld [vmem:[%s499 + $0x70] sm:$0xff]
        %v995 = vpack.c.bf16 %v981, %v980
        %v996 = vpack.c.bf16 %v983, %v982
        %v997 = vpack.c.bf16 %v985, %v984
        %v998 = vpack.c.bf16 %v987, %v986
        %v999 = vpack.c.bf16 %v989, %v988
        %v1000 = vpack.c.bf16 %v991, %v990
        %v1001 = vpack.c.bf16 %v993, %v992
        %v1002 = vpack.c.bf16 %v994, %v994
        %v1003 = vld [vmem:[%s5] sm:$0xf]
        %v1004 = vld [vmem:[%s5 + $0x4] sm:$0xf]
        %v1005 = vld [vmem:[%s5 + $0x8] sm:$0xf]
        %v1006 = vld [vmem:[%s5 + $0xc] sm:$0xf]
        %v1007 = vld [vmem:[%s5 + $0x10] sm:$0xf]
        %v1008 = vld [vmem:[%s5 + $0x14] sm:$0xf]
        %v1009 = vld [vmem:[%s5 + $0x18] sm:$0xf]
        %v1010 = vld [vmem:[%s5 + $0x1c] sm:$0xf]
        %v1011 = vld [vmem:[%s8] sm:$0xf]
        %v1012 = vld [vmem:[%s8 + $0x4] sm:$0xf]
        %v1013 = vld [vmem:[%s8 + $0x8] sm:$0xf]
        %v1014 = vld [vmem:[%s8 + $0xc] sm:$0xf]
        %v1015 = vld [vmem:[%s8 + $0x10] sm:$0xf]
        %v1016 = vld [vmem:[%s8 + $0x14] sm:$0xf]
        %v1017 = vld [vmem:[%s8 + $0x18] sm:$0xf]
        %v1018 = vld [vmem:[%s8 + $0x1c] sm:$0xf]
        %v1027 = vunpack.c.l.b16 %v1011
        %v1028 = vunpack.c.l.b16 %v1012
        %v1029 = vunpack.c.l.b16 %v1013
        %v1030 = vunpack.c.l.b16 %v1014
        %v1031 = vunpack.c.l.b16 %v1015
        %v1032 = vunpack.c.l.b16 %v1016
        %v1033 = vunpack.c.l.b16 %v1017
        %v1034 = vunpack.c.l.b16 %v1018
        %v1035 = vpack.c.b16 %v1028, %v1027
        %v1036 = vpack.c.b16 %v1030, %v1029
        %v1037 = vpack.c.b16 %v1032, %v1031
        %v1038 = vpack.c.b16 %v1034, %v1033
        %v1044 = vsel %vm595, %v995, 0
        %v1047 = vsel %vm595, %v996, 0
        %v1050 = vsel %vm595, %v997, 0
        %v1053 = vsel %vm595, %v998, 0
        %v1056 = vsel %vm595, %v999, 0
        %v1059 = vsel %vm595, %v1000, 0
        %v1062 = vsel %vm595, %v1001, 0
        %v1065 = vsel %vm595, %v1002, 0
        %1067 = vmatprep.subr.bf16.mxu0 0
        %1068 = vmatpush1.bf16.msra.mxu0 0
        %1069 = vmatprep.subr.bf16.mxu0 0
        %1070 = vmatpush1.bf16.msra.mxu0 0
        %1071 = vmatprep.subr.bf16.mxu0 0
        %1072 = vmatpush1.bf16.msra.mxu0 0
        %1073 = vmatprep.subr.bf16.mxu0 0
        %1074 = vmatpush1.bf16.msra.mxu0 0
        %1075 = vmatprep.subr.bf16.mxu0 0
        %1076 = vmatpush1.bf16.msra.mxu0 %v1038
        %1077 = vmatprep.subr.bf16.mxu0 0
        %1078 = vmatpush1.bf16.msra.mxu0 %v1037
        %1079 = vmatprep.subr.bf16.mxu0 0
        %1080 = vmatpush1.bf16.msra.mxu0 %v1036
        %1081 = vmatprep.subr.bf16.mxu0 0
        %1082 = vmatpush1.bf16.msra.mxu0 %v1035
        %1083 = vmatprep.subr.bf16.mxu0 0
        %1084 = vmatpush2.bf16.msra.mxu0 0
        %1085 = vmatprep.subr.bf16.mxu0 0
        %1086 = vmatpush2.bf16.msra.mxu0 0
        %1087 = vmatprep.subr.bf16.mxu0 0
        %1088 = vmatpush2.bf16.msra.mxu0 0
        %1089 = vmatprep.subr.bf16.mxu0 0
        %1090 = vmatpush2.bf16.msra.mxu0 0
        %1091 = vmatprep.subr.bf16.mxu0 0
        %1092 = vmatpush2.bf16.msra.mxu0 0
        %1093 = vmatprep.subr.bf16.mxu0 0
        %1094 = vmatpush2.bf16.msra.mxu0 0
        %1095 = vmatprep.subr.bf16.mxu0 0
        %1096 = vmatpush2.bf16.msra.mxu0 0
        %1097 = vmatprep.subr.bf16.mxu0 0
        %1098 = vmatpush2.bf16.msra.mxu0 0
        %1099 = vmatprep.mubr.bf16.mxu0 0
        %1100 = vmatmul.mubr.bf16.gmra.mxu0 %v1044
        %v1101 = vpop.f32.mrf.mxu0
        %v1102 = vadd.f32 0.0, %v1101
        %v1103 = vpop.f32.mrf.mxu0
        %v1104 = vpop.f32.mrf.mxu0
        %v1105 = vadd.f32 0.0, %v1104
        %v1106 = vpop.f32.mrf.mxu0
        %1107 = vmatprep.mubr.bf16.mxu0 0
        %1108 = vmatmul.mubr.bf16.gmra.mxu0 %v1047
        %v1109 = vpop.f32.mrf.mxu0
        %v1110 = vadd.f32 0.0, %v1109
        %v1111 = vpop.f32.mrf.mxu0
        %v1112 = vpop.f32.mrf.mxu0
        %v1113 = vadd.f32 0.0, %v1112
        %v1114 = vpop.f32.mrf.mxu0
        %1115 = vmatprep.mubr.bf16.mxu0 0
        %1116 = vmatmul.mubr.bf16.gmra.mxu0 %v1050
        %v1117 = vpop.f32.mrf.mxu0
        %v1118 = vadd.f32 0.0, %v1117
        %v1119 = vpop.f32.mrf.mxu0
        %v1120 = vpop.f32.mrf.mxu0
        %v1121 = vadd.f32 0.0, %v1120
        %v1122 = vpop.f32.mrf.mxu0
        %1123 = vmatprep.mubr.bf16.mxu0 0
        %1124 = vmatmul.mubr.bf16.gmra.mxu0 %v1053
        %v1125 = vpop.f32.mrf.mxu0
        %v1126 = vadd.f32 0.0, %v1125
        %v1127 = vpop.f32.mrf.mxu0
        %v1128 = vpop.f32.mrf.mxu0
        %v1129 = vadd.f32 0.0, %v1128
        %v1130 = vpop.f32.mrf.mxu0
        %1131 = vmatprep.mubr.bf16.mxu0 0
        %1132 = vmatmul.mubr.bf16.gmra.mxu0 %v1056
        %v1133 = vpop.f32.mrf.mxu0
        %v1134 = vadd.f32 0.0, %v1133
        %v1135 = vpop.f32.mrf.mxu0
        %v1136 = vpop.f32.mrf.mxu0
        %v1137 = vadd.f32 0.0, %v1136
        %v1138 = vpop.f32.mrf.mxu0
        %1139 = vmatprep.mubr.bf16.mxu0 0
        %1140 = vmatmul.mubr.bf16.gmra.mxu0 %v1059
        %v1141 = vpop.f32.mrf.mxu0
        %v1142 = vadd.f32 0.0, %v1141
        %v1143 = vpop.f32.mrf.mxu0
        %v1144 = vpop.f32.mrf.mxu0
        %v1145 = vadd.f32 0.0, %v1144
        %v1146 = vpop.f32.mrf.mxu0
        %1147 = vmatprep.mubr.bf16.mxu0 0
        %1148 = vmatmul.mubr.bf16.gmra.mxu0 %v1062
        %v1149 = vpop.f32.mrf.mxu0
        %v1150 = vadd.f32 0.0, %v1149
        %v1151 = vpop.f32.mrf.mxu0
        %v1152 = vpop.f32.mrf.mxu0
        %v1153 = vadd.f32 0.0, %v1152
        %v1154 = vpop.f32.mrf.mxu0
        %1155 = vmatprep.mubr.bf16.mxu0 0
        %1156 = vmatmul.mubr.bf16.gmra.mxu0 %v1065
        %v1157 = vpop.f32.mrf.mxu0
        %v1158 = vadd.f32 0.0, %v1157
        %v1159 = vpop.f32.mrf.mxu0
        %v1160 = vpop.f32.mrf.mxu0
        %v1161 = vpop.f32.mrf.mxu0
        %1162 = vdwg.mxu0
        %v1171 = vunpack.c.l.b16 %v1003
        %v1172 = vunpack.c.l.b16 %v1004
        %v1173 = vunpack.c.l.b16 %v1005
        %v1174 = vunpack.c.l.b16 %v1006
        %v1175 = vunpack.c.l.b16 %v1007
        %v1176 = vunpack.c.l.b16 %v1008
        %v1177 = vunpack.c.l.b16 %v1009
        %v1178 = vunpack.c.l.b16 %v1010
        %v1179 = vpack.c.b16 %v1172, %v1171
        %v1180 = vpack.c.b16 %v1174, %v1173
        %v1181 = vpack.c.b16 %v1176, %v1175
        %v1182 = vpack.c.b16 %v1178, %v1177
        %v1188 = vsel %vm595, %v972, 0
        %v1191 = vsel %vm595, %v973, 0
        %v1194 = vsel %vm595, %v974, 0
        %v1197 = vsel %vm595, %v975, 0
        %v1200 = vsel %vm595, %v976, 0
        %v1203 = vsel %vm595, %v977, 0
        %v1206 = vsel %vm595, %v978, 0
        %v1209 = vsel %vm595, %v979, 0
        %1211 = vmatprep.subr.bf16.mxu0 0
        %1212 = vmatpush1.bf16.msra.mxu0 0
        %1213 = vmatprep.subr.bf16.mxu0 0
        %1214 = vmatpush1.bf16.msra.mxu0 0
        %1215 = vmatprep.subr.bf16.mxu0 0
        %1216 = vmatpush1.bf16.msra.mxu0 0
        %1217 = vmatprep.subr.bf16.mxu0 0
        %1218 = vmatpush1.bf16.msra.mxu0 0
        %1219 = vmatprep.subr.bf16.mxu0 0
        %1220 = vmatpush1.bf16.msra.mxu0 %v1182
        %1221 = vmatprep.subr.bf16.mxu0 0
        %1222 = vmatpush1.bf16.msra.mxu0 %v1181
        %1223 = vmatprep.subr.bf16.mxu0 0
        %1224 = vmatpush1.bf16.msra.mxu0 %v1180
        %1225 = vmatprep.subr.bf16.mxu0 0
        %1226 = vmatpush1.bf16.msra.mxu0 %v1179
        %1227 = vmatprep.subr.bf16.mxu0 0
        %1228 = vmatpush2.bf16.msra.mxu0 0
        %1229 = vmatprep.subr.bf16.mxu0 0
        %1230 = vmatpush2.bf16.msra.mxu0 0
        %1231 = vmatprep.subr.bf16.mxu0 0
        %1232 = vmatpush2.bf16.msra.mxu0 0
        %1233 = vmatprep.subr.bf16.mxu0 0
        %1234 = vmatpush2.bf16.msra.mxu0 0
        %1235 = vmatprep.subr.bf16.mxu0 0
        %1236 = vmatpush2.bf16.msra.mxu0 0
        %1237 = vmatprep.subr.bf16.mxu0 0
        %1238 = vmatpush2.bf16.msra.mxu0 0
        %1239 = vmatprep.subr.bf16.mxu0 0
        %1240 = vmatpush2.bf16.msra.mxu0 0
        %1241 = vmatprep.subr.bf16.mxu0 0
        %1242 = vmatpush2.bf16.msra.mxu0 0
        %1243 = vmatprep.mubr.bf16.mxu0 0
        %1244 = vmatmul.mubr.bf16.gmra.mxu0 %v1188
        %v1245 = vpop.f32.mrf.mxu0
        %v1246 = vadd.f32 %v1102, %v1245
        %v1247 = vpop.f32.mrf.mxu0
        %v1248 = vpop.f32.mrf.mxu0
        %v1249 = vadd.f32 %v1105, %v1248
        %v1250 = vpop.f32.mrf.mxu0
        %1251 = vmatprep.mubr.bf16.mxu0 0
        %1252 = vmatmul.mubr.bf16.gmra.mxu0 %v1191
        %v1253 = vpop.f32.mrf.mxu0
        %v1254 = vadd.f32 %v1110, %v1253
        %v1255 = vpop.f32.mrf.mxu0
        %v1256 = vpop.f32.mrf.mxu0
        %v1257 = vadd.f32 %v1113, %v1256
        %v1258 = vpop.f32.mrf.mxu0
        %1259 = vmatprep.mubr.bf16.mxu0 0
        %1260 = vmatmul.mubr.bf16.gmra.mxu0 %v1194
        %v1261 = vpop.f32.mrf.mxu0
        %v1262 = vadd.f32 %v1118, %v1261
        %v1263 = vpop.f32.mrf.mxu0
        %v1264 = vpop.f32.mrf.mxu0
        %v1265 = vadd.f32 %v1121, %v1264
        %v1266 = vpop.f32.mrf.mxu0
        %1267 = vmatprep.mubr.bf16.mxu0 0
        %1268 = vmatmul.mubr.bf16.gmra.mxu0 %v1197
        %v1269 = vpop.f32.mrf.mxu0
        %v1270 = vadd.f32 %v1126, %v1269
        %v1271 = vpop.f32.mrf.mxu0
        %v1272 = vpop.f32.mrf.mxu0
        %v1273 = vadd.f32 %v1129, %v1272
        %v1274 = vpop.f32.mrf.mxu0
        %1275 = vmatprep.mubr.bf16.mxu0 0
        %1276 = vmatmul.mubr.bf16.gmra.mxu0 %v1200
        %v1277 = vpop.f32.mrf.mxu0
        %v1278 = vadd.f32 %v1134, %v1277
        %v1279 = vpop.f32.mrf.mxu0
        %v1280 = vpop.f32.mrf.mxu0
        %v1281 = vadd.f32 %v1137, %v1280
        %v1282 = vpop.f32.mrf.mxu0
        %1283 = vmatprep.mubr.bf16.mxu0 0
        %1284 = vmatmul.mubr.bf16.gmra.mxu0 %v1203
        %v1285 = vpop.f32.mrf.mxu0
        %v1286 = vadd.f32 %v1142, %v1285
        %v1287 = vpop.f32.mrf.mxu0
        %v1288 = vpop.f32.mrf.mxu0
        %v1289 = vadd.f32 %v1145, %v1288
        %v1290 = vpop.f32.mrf.mxu0
        %1291 = vmatprep.mubr.bf16.mxu0 0
        %1292 = vmatmul.mubr.bf16.gmra.mxu0 %v1206
        %v1293 = vpop.f32.mrf.mxu0
        %v1294 = vadd.f32 %v1150, %v1293
        %v1295 = vpop.f32.mrf.mxu0
        %v1296 = vpop.f32.mrf.mxu0
        %v1297 = vadd.f32 %v1153, %v1296
        %v1298 = vpop.f32.mrf.mxu0
        %1299 = vmatprep.mubr.bf16.mxu0 0
        %1300 = vmatmul.mubr.bf16.gmra.mxu0 %v1209
        %v1301 = vpop.f32.mrf.mxu0
        %v1302 = vadd.f32 %v1158, %v1301
        %v1303 = vpop.f32.mrf.mxu0
        %v1304 = vpop.f32.mrf.mxu0
        %v1305 = vpop.f32.mrf.mxu0
        %1306 = vdwg.mxu0
        %v1307 = vld [vmem:[%s11] sm:$0x1]
        %v1309 = vlaneseq
        %v1310 = vshrl.u32 %v1309, 7
        %v1311 = vsub.s32 0, %v1310
        %v1312 = vrot.slane %v1307, %v1311
        %v1314 = vadd.f32 %v1246, %v1312
        %v1315 = vadd.f32 %v1249, %v1312
        %v1316 = vadd.f32 %v1254, %v1312
        %v1317 = vadd.f32 %v1257, %v1312
        %v1318 = vadd.f32 %v1262, %v1312
        %v1319 = vadd.f32 %v1265, %v1312
        %v1320 = vadd.f32 %v1270, %v1312
        %v1321 = vadd.f32 %v1273, %v1312
        %v1322 = vadd.f32 %v1278, %v1312
        %v1323 = vadd.f32 %v1281, %v1312
        %v1324 = vadd.f32 %v1286, %v1312
        %v1325 = vadd.f32 %v1289, %v1312
        %v1326 = vadd.f32 %v1294, %v1312
        %v1327 = vadd.f32 %v1297, %v1312
        %v1328 = vadd.f32 %v1302, %v1312
        %vm1329 = vcmp.gt.f32.partialorder %v1314, 0.0
        %vm1330 = vcmp.gt.f32.partialorder %v1315, 0.0
        %vm1331 = vcmp.gt.f32.partialorder %v1316, 0.0
        %vm1332 = vcmp.gt.f32.partialorder %v1317, 0.0
        %vm1333 = vcmp.gt.f32.partialorder %v1318, 0.0
        %vm1334 = vcmp.gt.f32.partialorder %v1319, 0.0
        %vm1335 = vcmp.gt.f32.partialorder %v1320, 0.0
        %vm1336 = vcmp.gt.f32.partialorder %v1321, 0.0
        %vm1337 = vcmp.gt.f32.partialorder %v1322, 0.0
        %vm1338 = vcmp.gt.f32.partialorder %v1323, 0.0
        %vm1339 = vcmp.gt.f32.partialorder %v1324, 0.0
        %vm1340 = vcmp.gt.f32.partialorder %v1325, 0.0
        %vm1341 = vcmp.gt.f32.partialorder %v1326, 0.0
        %vm1342 = vcmp.gt.f32.partialorder %v1327, 0.0
        %vm1343 = vcmp.gt.f32.partialorder %v1328, 0.0
        %v1344 = vmin.f32 %v1314, 0.0
        %v1345 = vmin.f32 %v1315, 0.0
        %v1346 = vmin.f32 %v1316, 0.0
        %v1347 = vmin.f32 %v1317, 0.0
        %v1348 = vmin.f32 %v1318, 0.0
        %v1349 = vmin.f32 %v1319, 0.0
        %v1350 = vmin.f32 %v1320, 0.0
        %v1351 = vmin.f32 %v1321, 0.0
        %v1352 = vmin.f32 %v1322, 0.0
        %v1353 = vmin.f32 %v1323, 0.0
        %v1354 = vmin.f32 %v1324, 0.0
        %v1355 = vmin.f32 %v1325, 0.0
        %v1356 = vmin.f32 %v1326, 0.0
        %v1357 = vmin.f32 %v1327, 0.0
        %v1358 = vmin.f32 %v1328, 0.0
        %v1359 = vmul.f32 %v1344, 1.442695
        %v1360 = vpow.pop %v1359
        %v1361 = vmul.f32 %v1345, 1.442695
        %v1362 = vpow.pop %v1361
        %v1363 = vmul.f32 %v1346, 1.442695
        %v1364 = vpow.pop %v1363
        %v1365 = vmul.f32 %v1347, 1.442695
        %v1366 = vpow.pop %v1365
        %v1367 = vmul.f32 %v1348, 1.442695
        %v1368 = vpow.pop %v1367
        %v1369 = vmul.f32 %v1349, 1.442695
        %v1370 = vpow.pop %v1369
        %v1371 = vmul.f32 %v1350, 1.442695
        %v1372 = vpow.pop %v1371
        %v1373 = vmul.f32 %v1351, 1.442695
        %v1374 = vpow.pop %v1373
        %v1375 = vmul.f32 %v1352, 1.442695
        %v1376 = vpow.pop %v1375
        %v1377 = vmul.f32 %v1353, 1.442695
        %v1378 = vpow.pop %v1377
        %v1379 = vmul.f32 %v1354, 1.442695
        %v1380 = vpow.pop %v1379
        %v1381 = vmul.f32 %v1355, 1.442695
        %v1382 = vpow.pop %v1381
        %v1383 = vmul.f32 %v1356, 1.442695
        %v1384 = vpow.pop %v1383
        %v1385 = vmul.f32 %v1357, 1.442695
        %v1386 = vpow.pop %v1385
        %v1387 = vmul.f32 %v1358, 1.442695
        %v1388 = vpow.pop %v1387
        %v1389 = vsub.f32 %v1360, 1.0
        %v1390 = vsub.f32 %v1362, 1.0
        %v1391 = vsub.f32 %v1364, 1.0
        %v1392 = vsub.f32 %v1366, 1.0
        %v1393 = vsub.f32 %v1368, 1.0
        %v1394 = vsub.f32 %v1370, 1.0
        %v1395 = vsub.f32 %v1372, 1.0
        %v1396 = vsub.f32 %v1374, 1.0
        %v1397 = vsub.f32 %v1376, 1.0
        %v1398 = vsub.f32 %v1378, 1.0
        %v1399 = vsub.f32 %v1380, 1.0
        %v1400 = vsub.f32 %v1382, 1.0
        %v1401 = vsub.f32 %v1384, 1.0
        %v1402 = vsub.f32 %v1386, 1.0
        %v1403 = vsub.f32 %v1388, 1.0
        %v1404 = vsel %vm1329, %v1314, %v1389
        %v1405 = vsel %vm1330, %v1315, %v1390
        %v1406 = vsel %vm1331, %v1316, %v1391
        %v1407 = vsel %vm1332, %v1317, %v1392
        %v1408 = vsel %vm1333, %v1318, %v1393
        %v1409 = vsel %vm1334, %v1319, %v1394
        %v1410 = vsel %vm1335, %v1320, %v1395
        %v1411 = vsel %vm1336, %v1321, %v1396
        %v1412 = vsel %vm1337, %v1322, %v1397
        %v1413 = vsel %vm1338, %v1323, %v1398
        %v1414 = vsel %vm1339, %v1324, %v1399
        %v1415 = vsel %vm1340, %v1325, %v1400
        %v1416 = vsel %vm1341, %v1326, %v1401
        %v1417 = vsel %vm1342, %v1327, %v1402
        %v1418 = vsel %vm1343, %v1328, %v1403
        %v1419 = vpack.c.bf16 %v1405, %v1404
        %v1420 = vpack.c.bf16 %v1407, %v1406
        %v1421 = vpack.c.bf16 %v1409, %v1408
        %v1422 = vpack.c.bf16 %v1411, %v1410
        %v1423 = vpack.c.bf16 %v1413, %v1412
        %v1424 = vpack.c.bf16 %v1415, %v1414
        %v1425 = vpack.c.bf16 %v1417, %v1416
        %v1426 = vpack.c.bf16 %v1418, %v1418
        %v1427 = vld [vmem:[%s505] sm:$0xff]
        %v1428 = vld [vmem:[%s505 + $0x8] sm:$0xff]
        %v1429 = vld [vmem:[%s505 + $0x10] sm:$0xff]
        %v1430 = vld [vmem:[%s505 + $0x18] sm:$0xff]
        %v1431 = vld [vmem:[%s505 + $0x20] sm:$0xff]
        %v1432 = vld [vmem:[%s505 + $0x28] sm:$0xff]
        %v1433 = vld [vmem:[%s505 + $0x30] sm:$0xff]
        %v1434 = vld [vmem:[%s505 + $0x38] sm:$0xff]
        %v1435 = vld [vmem:[%s505 + $0x40] sm:$0xff]
        %v1436 = vld [vmem:[%s505 + $0x48] sm:$0xff]
        %v1437 = vld [vmem:[%s505 + $0x50] sm:$0xff]
        %v1438 = vld [vmem:[%s505 + $0x58] sm:$0xff]
        %v1439 = vld [vmem:[%s505 + $0x60] sm:$0xff]
        %v1440 = vld [vmem:[%s505 + $0x68] sm:$0xff]
        %v1441 = vld [vmem:[%s505 + $0x70] sm:$0xff]
        %v1442 = vpack.c.bf16 %v1428, %v1427
        %v1443 = vpack.c.bf16 %v1430, %v1429
        %v1444 = vpack.c.bf16 %v1432, %v1431
        %v1445 = vpack.c.bf16 %v1434, %v1433
        %v1446 = vpack.c.bf16 %v1436, %v1435
        %v1447 = vpack.c.bf16 %v1438, %v1437
        %v1448 = vpack.c.bf16 %v1440, %v1439
        %v1449 = vpack.c.bf16 %v1441, %v1441
        %v1450 = vld [vmem:[%s6] sm:$0xf]
        %v1451 = vld [vmem:[%s6 + $0x4] sm:$0xf]
        %v1452 = vld [vmem:[%s6 + $0x8] sm:$0xf]
        %v1453 = vld [vmem:[%s6 + $0xc] sm:$0xf]
        %v1454 = vld [vmem:[%s6 + $0x10] sm:$0xf]
        %v1455 = vld [vmem:[%s6 + $0x14] sm:$0xf]
        %v1456 = vld [vmem:[%s6 + $0x18] sm:$0xf]
        %v1457 = vld [vmem:[%s6 + $0x1c] sm:$0xf]
        %v1458 = vld [vmem:[%s9] sm:$0xf]
        %v1459 = vld [vmem:[%s9 + $0x4] sm:$0xf]
        %v1460 = vld [vmem:[%s9 + $0x8] sm:$0xf]
        %v1461 = vld [vmem:[%s9 + $0xc] sm:$0xf]
        %v1462 = vld [vmem:[%s9 + $0x10] sm:$0xf]
        %v1463 = vld [vmem:[%s9 + $0x14] sm:$0xf]
        %v1464 = vld [vmem:[%s9 + $0x18] sm:$0xf]
        %v1465 = vld [vmem:[%s9 + $0x1c] sm:$0xf]
        %v1474 = vunpack.c.l.b16 %v1458
        %v1475 = vunpack.c.l.b16 %v1459
        %v1476 = vunpack.c.l.b16 %v1460
        %v1477 = vunpack.c.l.b16 %v1461
        %v1478 = vunpack.c.l.b16 %v1462
        %v1479 = vunpack.c.l.b16 %v1463
        %v1480 = vunpack.c.l.b16 %v1464
        %v1481 = vunpack.c.l.b16 %v1465
        %v1482 = vpack.c.b16 %v1475, %v1474
        %v1483 = vpack.c.b16 %v1477, %v1476
        %v1484 = vpack.c.b16 %v1479, %v1478
        %v1485 = vpack.c.b16 %v1481, %v1480
        %v1491 = vsel %vm595, %v1442, 0
        %v1494 = vsel %vm595, %v1443, 0
        %v1497 = vsel %vm595, %v1444, 0
        %v1500 = vsel %vm595, %v1445, 0
        %v1503 = vsel %vm595, %v1446, 0
        %v1506 = vsel %vm595, %v1447, 0
        %v1509 = vsel %vm595, %v1448, 0
        %v1512 = vsel %vm595, %v1449, 0
        %1514 = vmatprep.subr.bf16.mxu0 0
        %1515 = vmatpush1.bf16.msra.mxu0 0
        %1516 = vmatprep.subr.bf16.mxu0 0
        %1517 = vmatpush1.bf16.msra.mxu0 0
        %1518 = vmatprep.subr.bf16.mxu0 0
        %1519 = vmatpush1.bf16.msra.mxu0 0
        %1520 = vmatprep.subr.bf16.mxu0 0
        %1521 = vmatpush1.bf16.msra.mxu0 0
        %1522 = vmatprep.subr.bf16.mxu0 0
        %1523 = vmatpush1.bf16.msra.mxu0 %v1485
        %1524 = vmatprep.subr.bf16.mxu0 0
        %1525 = vmatpush1.bf16.msra.mxu0 %v1484
        %1526 = vmatprep.subr.bf16.mxu0 0
        %1527 = vmatpush1.bf16.msra.mxu0 %v1483
        %1528 = vmatprep.subr.bf16.mxu0 0
        %1529 = vmatpush1.bf16.msra.mxu0 %v1482
        %1530 = vmatprep.subr.bf16.mxu0 0
        %1531 = vmatpush2.bf16.msra.mxu0 0
        %1532 = vmatprep.subr.bf16.mxu0 0
        %1533 = vmatpush2.bf16.msra.mxu0 0
        %1534 = vmatprep.subr.bf16.mxu0 0
        %1535 = vmatpush2.bf16.msra.mxu0 0
        %1536 = vmatprep.subr.bf16.mxu0 0
        %1537 = vmatpush2.bf16.msra.mxu0 0
        %1538 = vmatprep.subr.bf16.mxu0 0
        %1539 = vmatpush2.bf16.msra.mxu0 0
        %1540 = vmatprep.subr.bf16.mxu0 0
        %1541 = vmatpush2.bf16.msra.mxu0 0
        %1542 = vmatprep.subr.bf16.mxu0 0
        %1543 = vmatpush2.bf16.msra.mxu0 0
        %1544 = vmatprep.subr.bf16.mxu0 0
        %1545 = vmatpush2.bf16.msra.mxu0 0
        %1546 = vmatprep.mubr.bf16.mxu0 0
        %1547 = vmatmul.mubr.bf16.gmra.mxu0 %v1491
        %v1548 = vpop.f32.mrf.mxu0
        %v1549 = vadd.f32 0.0, %v1548
        %v1550 = vpop.f32.mrf.mxu0
        %v1551 = vpop.f32.mrf.mxu0
        %v1552 = vadd.f32 0.0, %v1551
        %v1553 = vpop.f32.mrf.mxu0
        %1554 = vmatprep.mubr.bf16.mxu0 0
        %1555 = vmatmul.mubr.bf16.gmra.mxu0 %v1494
        %v1556 = vpop.f32.mrf.mxu0
        %v1557 = vadd.f32 0.0, %v1556
        %v1558 = vpop.f32.mrf.mxu0
        %v1559 = vpop.f32.mrf.mxu0
        %v1560 = vadd.f32 0.0, %v1559
        %v1561 = vpop.f32.mrf.mxu0
        %1562 = vmatprep.mubr.bf16.mxu0 0
        %1563 = vmatmul.mubr.bf16.gmra.mxu0 %v1497
        %v1564 = vpop.f32.mrf.mxu0
        %v1565 = vadd.f32 0.0, %v1564
        %v1566 = vpop.f32.mrf.mxu0
        %v1567 = vpop.f32.mrf.mxu0
        %v1568 = vadd.f32 0.0, %v1567
        %v1569 = vpop.f32.mrf.mxu0
        %1570 = vmatprep.mubr.bf16.mxu0 0
        %1571 = vmatmul.mubr.bf16.gmra.mxu0 %v1500
        %v1572 = vpop.f32.mrf.mxu0
        %v1573 = vadd.f32 0.0, %v1572
        %v1574 = vpop.f32.mrf.mxu0
        %v1575 = vpop.f32.mrf.mxu0
        %v1576 = vadd.f32 0.0, %v1575
        %v1577 = vpop.f32.mrf.mxu0
        %1578 = vmatprep.mubr.bf16.mxu0 0
        %1579 = vmatmul.mubr.bf16.gmra.mxu0 %v1503
        %v1580 = vpop.f32.mrf.mxu0
        %v1581 = vadd.f32 0.0, %v1580
        %v1582 = vpop.f32.mrf.mxu0
        %v1583 = vpop.f32.mrf.mxu0
        %v1584 = vadd.f32 0.0, %v1583
        %v1585 = vpop.f32.mrf.mxu0
        %1586 = vmatprep.mubr.bf16.mxu0 0
        %1587 = vmatmul.mubr.bf16.gmra.mxu0 %v1506
        %v1588 = vpop.f32.mrf.mxu0
        %v1589 = vadd.f32 0.0, %v1588
        %v1590 = vpop.f32.mrf.mxu0
        %v1591 = vpop.f32.mrf.mxu0
        %v1592 = vadd.f32 0.0, %v1591
        %v1593 = vpop.f32.mrf.mxu0
        %1594 = vmatprep.mubr.bf16.mxu0 0
        %1595 = vmatmul.mubr.bf16.gmra.mxu0 %v1509
        %v1596 = vpop.f32.mrf.mxu0
        %v1597 = vadd.f32 0.0, %v1596
        %v1598 = vpop.f32.mrf.mxu0
        %v1599 = vpop.f32.mrf.mxu0
        %v1600 = vadd.f32 0.0, %v1599
        %v1601 = vpop.f32.mrf.mxu0
        %1602 = vmatprep.mubr.bf16.mxu0 0
        %1603 = vmatmul.mubr.bf16.gmra.mxu0 %v1512
        %v1604 = vpop.f32.mrf.mxu0
        %v1605 = vadd.f32 0.0, %v1604
        %v1606 = vpop.f32.mrf.mxu0
        %v1607 = vpop.f32.mrf.mxu0
        %v1608 = vpop.f32.mrf.mxu0
        %1609 = vdwg.mxu0
        %v1618 = vunpack.c.l.b16 %v1450
        %v1619 = vunpack.c.l.b16 %v1451
        %v1620 = vunpack.c.l.b16 %v1452
        %v1621 = vunpack.c.l.b16 %v1453
        %v1622 = vunpack.c.l.b16 %v1454
        %v1623 = vunpack.c.l.b16 %v1455
        %v1624 = vunpack.c.l.b16 %v1456
        %v1625 = vunpack.c.l.b16 %v1457
        %v1626 = vpack.c.b16 %v1619, %v1618
        %v1627 = vpack.c.b16 %v1621, %v1620
        %v1628 = vpack.c.b16 %v1623, %v1622
        %v1629 = vpack.c.b16 %v1625, %v1624
        %v1635 = vsel %vm595, %v1419, 0
        %v1638 = vsel %vm595, %v1420, 0
        %v1641 = vsel %vm595, %v1421, 0
        %v1644 = vsel %vm595, %v1422, 0
        %v1647 = vsel %vm595, %v1423, 0
        %v1650 = vsel %vm595, %v1424, 0
        %v1653 = vsel %vm595, %v1425, 0
        %v1656 = vsel %vm595, %v1426, 0
        %1658 = vmatprep.subr.bf16.mxu0 0
        %1659 = vmatpush1.bf16.msra.mxu0 0
        %1660 = vmatprep.subr.bf16.mxu0 0
        %1661 = vmatpush1.bf16.msra.mxu0 0
        %1662 = vmatprep.subr.bf16.mxu0 0
        %1663 = vmatpush1.bf16.msra.mxu0 0
        %1664 = vmatprep.subr.bf16.mxu0 0
        %1665 = vmatpush1.bf16.msra.mxu0 0
        %1666 = vmatprep.subr.bf16.mxu0 0
        %1667 = vmatpush1.bf16.msra.mxu0 %v1629
        %1668 = vmatprep.subr.bf16.mxu0 0
        %1669 = vmatpush1.bf16.msra.mxu0 %v1628
        %1670 = vmatprep.subr.bf16.mxu0 0
        %1671 = vmatpush1.bf16.msra.mxu0 %v1627
        %1672 = vmatprep.subr.bf16.mxu0 0
        %1673 = vmatpush1.bf16.msra.mxu0 %v1626
        %1674 = vmatprep.subr.bf16.mxu0 0
        %1675 = vmatpush2.bf16.msra.mxu0 0
        %1676 = vmatprep.subr.bf16.mxu0 0
        %1677 = vmatpush2.bf16.msra.mxu0 0
        %1678 = vmatprep.subr.bf16.mxu0 0
        %1679 = vmatpush2.bf16.msra.mxu0 0
        %1680 = vmatprep.subr.bf16.mxu0 0
        %1681 = vmatpush2.bf16.msra.mxu0 0
        %1682 = vmatprep.subr.bf16.mxu0 0
        %1683 = vmatpush2.bf16.msra.mxu0 0
        %1684 = vmatprep.subr.bf16.mxu0 0
        %1685 = vmatpush2.bf16.msra.mxu0 0
        %1686 = vmatprep.subr.bf16.mxu0 0
        %1687 = vmatpush2.bf16.msra.mxu0 0
        %1688 = vmatprep.subr.bf16.mxu0 0
        %1689 = vmatpush2.bf16.msra.mxu0 0
        %1690 = vmatprep.mubr.bf16.mxu0 0
        %1691 = vmatmul.mubr.bf16.gmra.mxu0 %v1635
        %v1692 = vpop.f32.mrf.mxu0
        %v1693 = vadd.f32 %v1549, %v1692
        %v1694 = vpop.f32.mrf.mxu0
        %v1695 = vpop.f32.mrf.mxu0
        %v1696 = vadd.f32 %v1552, %v1695
        %v1697 = vpop.f32.mrf.mxu0
        %1698 = vmatprep.mubr.bf16.mxu0 0
        %1699 = vmatmul.mubr.bf16.gmra.mxu0 %v1638
        %v1700 = vpop.f32.mrf.mxu0
        %v1701 = vadd.f32 %v1557, %v1700
        %v1702 = vpop.f32.mrf.mxu0
        %v1703 = vpop.f32.mrf.mxu0
        %v1704 = vadd.f32 %v1560, %v1703
        %v1705 = vpop.f32.mrf.mxu0
        %1706 = vmatprep.mubr.bf16.mxu0 0
        %1707 = vmatmul.mubr.bf16.gmra.mxu0 %v1641
        %v1708 = vpop.f32.mrf.mxu0
        %v1709 = vadd.f32 %v1565, %v1708
        %v1710 = vpop.f32.mrf.mxu0
        %v1711 = vpop.f32.mrf.mxu0
        %v1712 = vadd.f32 %v1568, %v1711
        %v1713 = vpop.f32.mrf.mxu0
        %1714 = vmatprep.mubr.bf16.mxu0 0
        %1715 = vmatmul.mubr.bf16.gmra.mxu0 %v1644
        %v1716 = vpop.f32.mrf.mxu0
        %v1717 = vadd.f32 %v1573, %v1716
        %v1718 = vpop.f32.mrf.mxu0
        %v1719 = vpop.f32.mrf.mxu0
        %v1720 = vadd.f32 %v1576, %v1719
        %v1721 = vpop.f32.mrf.mxu0
        %1722 = vmatprep.mubr.bf16.mxu0 0
        %1723 = vmatmul.mubr.bf16.gmra.mxu0 %v1647
        %v1724 = vpop.f32.mrf.mxu0
        %v1725 = vadd.f32 %v1581, %v1724
        %v1726 = vpop.f32.mrf.mxu0
        %v1727 = vpop.f32.mrf.mxu0
        %v1728 = vadd.f32 %v1584, %v1727
        %v1729 = vpop.f32.mrf.mxu0
        %1730 = vmatprep.mubr.bf16.mxu0 0
        %1731 = vmatmul.mubr.bf16.gmra.mxu0 %v1650
        %v1732 = vpop.f32.mrf.mxu0
        %v1733 = vadd.f32 %v1589, %v1732
        %v1734 = vpop.f32.mrf.mxu0
        %v1735 = vpop.f32.mrf.mxu0
        %v1736 = vadd.f32 %v1592, %v1735
        %v1737 = vpop.f32.mrf.mxu0
        %1738 = vmatprep.mubr.bf16.mxu0 0
        %1739 = vmatmul.mubr.bf16.gmra.mxu0 %v1653
        %v1740 = vpop.f32.mrf.mxu0
        %v1741 = vadd.f32 %v1597, %v1740
        %v1742 = vpop.f32.mrf.mxu0
        %v1743 = vpop.f32.mrf.mxu0
        %v1744 = vadd.f32 %v1600, %v1743
        %v1745 = vpop.f32.mrf.mxu0
        %1746 = vmatprep.mubr.bf16.mxu0 0
        %1747 = vmatmul.mubr.bf16.gmra.mxu0 %v1656
        %v1748 = vpop.f32.mrf.mxu0
        %v1749 = vadd.f32 %v1605, %v1748
        %v1750 = vpop.f32.mrf.mxu0
        %v1751 = vpop.f32.mrf.mxu0
        %v1752 = vpop.f32.mrf.mxu0
        %1753 = vdwg.mxu0
        %v1754 = vld [vmem:[%s12] sm:$0x1]
        %v1756 = vlaneseq
        %v1757 = vshrl.u32 %v1756, 7
        %v1758 = vsub.s32 0, %v1757
        %v1759 = vrot.slane %v1754, %v1758
        %v1761 = vadd.f32 %v1693, %v1759
        %v1762 = vadd.f32 %v1696, %v1759
        %v1763 = vadd.f32 %v1701, %v1759
        %v1764 = vadd.f32 %v1704, %v1759
        %v1765 = vadd.f32 %v1709, %v1759
        %v1766 = vadd.f32 %v1712, %v1759
        %v1767 = vadd.f32 %v1717, %v1759
        %v1768 = vadd.f32 %v1720, %v1759
        %v1769 = vadd.f32 %v1725, %v1759
        %v1770 = vadd.f32 %v1728, %v1759
        %v1771 = vadd.f32 %v1733, %v1759
        %v1772 = vadd.f32 %v1736, %v1759
        %v1773 = vadd.f32 %v1741, %v1759
        %v1774 = vadd.f32 %v1744, %v1759
        %v1775 = vadd.f32 %v1749, %v1759
        %vm1776 = vcmp.gt.f32.partialorder %v1761, 0.0
        %vm1777 = vcmp.gt.f32.partialorder %v1762, 0.0
        %vm1778 = vcmp.gt.f32.partialorder %v1763, 0.0
        %vm1779 = vcmp.gt.f32.partialorder %v1764, 0.0
        %vm1780 = vcmp.gt.f32.partialorder %v1765, 0.0
        %vm1781 = vcmp.gt.f32.partialorder %v1766, 0.0
        %vm1782 = vcmp.gt.f32.partialorder %v1767, 0.0
        %vm1783 = vcmp.gt.f32.partialorder %v1768, 0.0
        %vm1784 = vcmp.gt.f32.partialorder %v1769, 0.0
        %vm1785 = vcmp.gt.f32.partialorder %v1770, 0.0
        %vm1786 = vcmp.gt.f32.partialorder %v1771, 0.0
        %vm1787 = vcmp.gt.f32.partialorder %v1772, 0.0
        %vm1788 = vcmp.gt.f32.partialorder %v1773, 0.0
        %vm1789 = vcmp.gt.f32.partialorder %v1774, 0.0
        %vm1790 = vcmp.gt.f32.partialorder %v1775, 0.0
        %v1791 = vmin.f32 %v1761, 0.0
        %v1792 = vmin.f32 %v1762, 0.0
        %v1793 = vmin.f32 %v1763, 0.0
        %v1794 = vmin.f32 %v1764, 0.0
        %v1795 = vmin.f32 %v1765, 0.0
        %v1796 = vmin.f32 %v1766, 0.0
        %v1797 = vmin.f32 %v1767, 0.0
        %v1798 = vmin.f32 %v1768, 0.0
        %v1799 = vmin.f32 %v1769, 0.0
        %v1800 = vmin.f32 %v1770, 0.0
        %v1801 = vmin.f32 %v1771, 0.0
        %v1802 = vmin.f32 %v1772, 0.0
        %v1803 = vmin.f32 %v1773, 0.0
        %v1804 = vmin.f32 %v1774, 0.0
        %v1805 = vmin.f32 %v1775, 0.0
        %v1806 = vmul.f32 %v1791, 1.442695
        %v1807 = vpow.pop %v1806
        %v1808 = vmul.f32 %v1792, 1.442695
        %v1809 = vpow.pop %v1808
        %v1810 = vmul.f32 %v1793, 1.442695
        %v1811 = vpow.pop %v1810
        %v1812 = vmul.f32 %v1794, 1.442695
        %v1813 = vpow.pop %v1812
        %v1814 = vmul.f32 %v1795, 1.442695
        %v1815 = vpow.pop %v1814
        %v1816 = vmul.f32 %v1796, 1.442695
        %v1817 = vpow.pop %v1816
        %v1818 = vmul.f32 %v1797, 1.442695
        %v1819 = vpow.pop %v1818
        %v1820 = vmul.f32 %v1798, 1.442695
        %v1821 = vpow.pop %v1820
        %v1822 = vmul.f32 %v1799, 1.442695
        %v1823 = vpow.pop %v1822
        %v1824 = vmul.f32 %v1800, 1.442695
        %v1825 = vpow.pop %v1824
        %v1826 = vmul.f32 %v1801, 1.442695
        %v1827 = vpow.pop %v1826
        %v1828 = vmul.f32 %v1802, 1.442695
        %v1829 = vpow.pop %v1828
        %v1830 = vmul.f32 %v1803, 1.442695
        %v1831 = vpow.pop %v1830
        %v1832 = vmul.f32 %v1804, 1.442695
        %v1833 = vpow.pop %v1832
        %v1834 = vmul.f32 %v1805, 1.442695
        %v1835 = vpow.pop %v1834
        %v1836 = vsub.f32 %v1807, 1.0
        %v1837 = vsub.f32 %v1809, 1.0
        %v1838 = vsub.f32 %v1811, 1.0
        %v1839 = vsub.f32 %v1813, 1.0
        %v1840 = vsub.f32 %v1815, 1.0
        %v1841 = vsub.f32 %v1817, 1.0
        %v1842 = vsub.f32 %v1819, 1.0
        %v1843 = vsub.f32 %v1821, 1.0
        %v1844 = vsub.f32 %v1823, 1.0
        %v1845 = vsub.f32 %v1825, 1.0
        %v1846 = vsub.f32 %v1827, 1.0
        %v1847 = vsub.f32 %v1829, 1.0
        %v1848 = vsub.f32 %v1831, 1.0
        %v1849 = vsub.f32 %v1833, 1.0
        %v1850 = vsub.f32 %v1835, 1.0
        %v1851 = vsel %vm1776, %v1761, %v1836
        %v1852 = vsel %vm1777, %v1762, %v1837
        %v1853 = vsel %vm1778, %v1763, %v1838
        %v1854 = vsel %vm1779, %v1764, %v1839
        %v1855 = vsel %vm1780, %v1765, %v1840
        %v1856 = vsel %vm1781, %v1766, %v1841
        %v1857 = vsel %vm1782, %v1767, %v1842
        %v1858 = vsel %vm1783, %v1768, %v1843
        %v1859 = vsel %vm1784, %v1769, %v1844
        %v1860 = vsel %vm1785, %v1770, %v1845
        %v1861 = vsel %vm1786, %v1771, %v1846
        %v1862 = vsel %vm1787, %v1772, %v1847
        %v1863 = vsel %vm1788, %v1773, %v1848
        %v1864 = vsel %vm1789, %v1774, %v1849
        %v1865 = vsel %vm1790, %v1775, %v1850
        %1866 = vst [vmem:[%s482] sm:$0xff] %v1851
        %1867 = vst [vmem:[%s482 + $0x8] sm:$0xff] %v1852
        %1868 = vst [vmem:[%s482 + $0x10] sm:$0xff] %v1853
        %1869 = vst [vmem:[%s482 + $0x18] sm:$0xff] %v1854
        %1870 = vst [vmem:[%s482 + $0x20] sm:$0xff] %v1855
        %1871 = vst [vmem:[%s482 + $0x28] sm:$0xff] %v1856
        %1872 = vst [vmem:[%s482 + $0x30] sm:$0xff] %v1857
        %1873 = vst [vmem:[%s482 + $0x38] sm:$0xff] %v1858
        %1874 = vst [vmem:[%s482 + $0x40] sm:$0xff] %v1859
        %1875 = vst [vmem:[%s482 + $0x48] sm:$0xff] %v1860
        %1876 = vst [vmem:[%s482 + $0x50] sm:$0xff] %v1861
        %1877 = vst [vmem:[%s482 + $0x58] sm:$0xff] %v1862
        %1878 = vst [vmem:[%s482 + $0x60] sm:$0xff] %v1863
        %1879 = vst [vmem:[%s482 + $0x68] sm:$0xff] %v1864
        %1880 = vst [vmem:[%s482 + $0x70] sm:$0xff] %v1865
        %s1881 = sand.u32 %s328, 1
        %s1882 = scalar_lea.sflag [#allocation3], %s1881
        %s1883 = sand.u32 %s328, 1
        %s1884 = smul.addr %s1883, 120
        %s1885 = scalar_lea.vmem [#allocation2], %s1884
        // Predicated region
        $region73: #{tpu_custom_call.1} parent=71 // pred_check
          %p1886 = pneg %p338
        $region74: #{tpu_custom_call.1} parent=71 // pred_check_branch
          %1888 = sbr.rel (%p1886) target = $region76
        $region75: #{tpu_custom_call.1} parent=71 // pred_region
          %s1889 = smul.u32 15, %s27
          %s1891 = ssub.s32 1920, 1920
          %1892 = vsyncadd %s1882, %s1891
          %s1893 = smul.addr %s1889, 128
          %s1894 = scalar_lea.hbm %s13, %s1893
          %s1895 = sshll.u32 %s1885, 4
          %s1896 = int_to_ptr.vmem [resolvable:$true] %s1895
          %1901 = dma.vmem_to_hbm [thread:$0]  %s1896, 1920, %s1894, %s1882, 128, 128, 8
        $region76: #{tpu_custom_call.1} parent=71 // pred_fallthru
          _
      $region72: #{tpu_custom_call.1} parent=5 // pred_fallthru
        _
      %p1902 = scmp.le.s32.totalorder 2, %s22
      // Predicated region
      $region77: #{tpu_custom_call.1} parent=5 // pred_check
        %p1903 = pneg %p1902
      $region78: #{tpu_custom_call.1} parent=5 // pred_check_branch
        %1905 = sbr.rel (%p1903) target = $region80
      $region79: #{tpu_custom_call.1} parent=5 // pred_region
        %s1906 = ssub.s32 %s22, 2
        // Predicated region
        $region81: #{tpu_custom_call.1} parent=79 // pred_check
          %p1907 = pneg %p344
        $region82: #{tpu_custom_call.1} parent=79 // pred_check_branch
          %1909 = sbr.rel (%p1907) target = $region84
        $region83: #{tpu_custom_call.1} parent=79 // pred_region
          %s1910 = sand.u32 %s329, 1
          %s1911 = scalar_lea.sflag [#allocation3], %s1910
          %s1912 = sand.u32 %s329, 1
          %s1913 = smul.addr %s1912, 120
          %s1914 = scalar_lea.vmem [#allocation2], %s1913
          %1915 = dma.done %s1911, 1920
        $region84: #{tpu_custom_call.1} parent=79 // pred_fallthru
          _
      $region80: #{tpu_custom_call.1} parent=5 // pred_fallthru
        _
    $region6: #{tpu_custom_call.1} parent=1 // loop_footer
      %s26 = sadd.s32 1, %s22
    $region7: #{tpu_custom_call.1} parent=1 // loop_footer_branch
      %21 = sbr.rel target = $region3
    $region8: #{tpu_custom_call.1} parent=1 // loop_exit
      _
    %1916 = vsyncpa [#allocation3], 1
    %s1917 = scalar_lea.sflag [#allocation3], 1
    %1918 = vsyncpa %s1917, 1

</llo_original>
